<compile_context>
chip_gen: v7x
topology: tpu7x:2x2x1
jax: 0.10.0
libtpu: 0.0.40
codegen_flags: <defaults>
</compile_context>

<pallas_src>
import numpy as np
import jax
import jax.numpy as jnp
from jax import lax
from jax.experimental import pallas as pl
from jax.experimental.pallas import tpu as pltpu

D_MODEL = 768     # ViT CLS embedding width fed to the survival head
H_LSTM = 128      # nn.LSTM hidden size
G4 = 4 * H_LSTM   # LSTM gate width (512)
BN_EPS = 1e-5


def _round_up(x, m):
    return ((x + m - 1) // m) * m


def _tile_m(M):
    """Row (parallel) tile: largest preferred tile <= padded M; pad M to it."""
    prefs = (1024, 512, 256, 128, 64, 32, 16, 8)
    tgt = _round_up(max(M, 8), 8)
    for p in prefs:
        if p <= tgt:
            return p, _round_up(M, p)
    return 8, _round_up(M, 8)


def _tile_p(P):
    """Reduction tile: prefer an exact divisor (no padding), else pad to a tile."""
    prefs = (1024, 512, 256, 128)
    for p in prefs:
        if P % p == 0:
            return p, P
    tgt = _round_up(max(P, 128), 128)
    for p in prefs:
        if p <= tgt:
            return p, _round_up(P, p)
    return 128, _round_up(P, 128)


def _vmem_limit_bytes():
    # Leave ample headroom: 3/4 of physical capacity (48 MiB on v7x, 96 MiB on
    # v5e/v6e) is far above what these kernels need (~16 MiB worst case).
    cap = 64 * 1024 * 1024
    try:
        info_cap = int(pltpu.get_tpu_info().vmem_capacity_bytes)
        if info_cap >= 32 * 1024 * 1024:
            cap = info_cap
    except Exception:
        pass
    return min(cap * 3 // 4, 96 * 1024 * 1024)


# ---------------------------------------------------------------------------
# Kernel 1: patch encoder stand-in -- tiled (M, P) @ (P, 768) + bias + tanh,
# with the attention score row-dot and the LSTM W_ih0 projection fused into
# the last reduction step (rides the existing accumulator/output pipeline).
# ---------------------------------------------------------------------------
def _encoder_kernel(x_ref, w_ref, b_ref, w_att_ref, b_att_ref, w_ih0_ref,
                    pg_ref, sc_ref, acc_ref):
    # TODO(synk): the frozen pretrained ViT patch encoder has no Pallas equivalent;
    # it is replaced by a deterministic linear + tanh projection to 768-d.
    k = pl.program_id(1)

    @pl.when(k == 0)
    def _():
        acc_ref[...] = jnp.zeros_like(acc_ref)

    acc_ref[...] += jnp.dot(x_ref[...], w_ref[...],
                            preferred_element_type=jnp.float32)

    @pl.when(k == pl.num_programs(1) - 1)
    def _():
        feat = jnp.tanh(acc_ref[...] + b_ref[...])                    # (tm, 768) f32
        # AttentionLayer score: VPU row-dot + XLU lane reduce.
        sc_ref[...] = (jnp.sum(feat * w_att_ref[...], axis=-1, keepdims=True)
                       + b_att_ref[...])                              # (tm, 1)
        # LSTM layer-0 input pre-gates (linearity: attn applied later in head).
        pg_ref[...] = jnp.dot(feat.astype(jnp.bfloat16), w_ih0_ref[...],
                              preferred_element_type=jnp.float32)     # (tm, 512)


# ---------------------------------------------------------------------------
# Kernel 2 (per slide): softmax attention reweight of pre-gates, fused 2-layer
# LSTM recurrence (time-major scratch, 1 load + 1 store per step), batched MLP
# head, lane-row output (1, 1, N).
# ---------------------------------------------------------------------------
def _make_head_kernel(n_patches):
    N = n_patches

    def kernel(pg_ref, sc_ref,
               b0_ref, w_hh0_ref, w_ih1_ref, w_hh1_ref, b1_ref,
               fc2w_ref, fc2b_ref, bn2_ref, fc3w_ref, fc3b_ref, bn3_ref,
               fc4w_ref, fc4b_ref,
               out_ref, xg_ref, hs_ref):
        Hh = H_LSTM
        bf16 = jnp.bfloat16

        pg = pg_ref[0]                                       # (N, 4H) f32
        sc = sc_ref[0]                                       # (N, 1)  f32

        # --- softmax over the patch axis (exact; off the critical path) ---
        s = sc - jnp.max(sc, axis=0, keepdims=True)
        e = jnp.exp(s)
        attn = e / jnp.sum(e, axis=0, keepdims=True)         # (N, 1)

        # layer-0 input gates for every time step; time-major scratch.
        xg_ref[...] = attn * pg + b0_ref[...]                # (N, 4H)

        w_hh0 = w_hh0_ref[...]
        w_ih1 = w_ih1_ref[...]
        w_hh1 = w_hh1_ref[...]
        b1 = b1_ref[...]

        def sig(v):                                          # sigmoid via EUP tanh
            return 0.5 * (jnp.tanh(0.5 * v) + 1.0)

        def gates(g):                                        # PyTorch order [i,f,g,o]
            return (sig(g[:, 0:Hh]), sig(g[:, Hh:2 * Hh]),
                    jnp.tanh(g[:, 2 * Hh:3 * Hh]), sig(g[:, 3 * Hh:4 * Hh]))

        # --- fused 2-layer LSTM recurrence ---
        def step(t, carry):
            h0, c0, h1, c1 = carry
            g0 = xg_ref[pl.ds(t, 1), :] + jnp.dot(
                h0.astype(bf16), w_hh0, preferred_element_type=jnp.float32)
            i0, f0, gg0, o0 = gates(g0)
            c0 = f0 * c0 + i0 * gg0
            h0 = o0 * jnp.tanh(c0)
            # layer 1 fed by layer-0's fresh h (inter-layer dropout = identity, eval)
            g1 = (jnp.dot(h0.astype(bf16), w_ih1, preferred_element_type=jnp.float32)
                  + jnp.dot(h1.astype(bf16), w_hh1, preferred_element_type=jnp.float32)
                  + b1)
            i1, f1, gg1, o1 = gates(g1)
            c1 = f1 * c1 + i1 * gg1
            h1 = o1 * jnp.tanh(c1)
            hs_ref[pl.ds(t, 1), :] = h1                      # contiguous row store
            return h0, c0, h1, c1

        z0 = jnp.zeros((1, Hh), jnp.float32)
        unroll = 4 if N % 4 == 0 else (2 if N % 2 == 0 else 1)
        lax.fori_loop(0, N, step, (z0, z0, z0, z0), unroll=unroll)

        # --- MLP head, batched over all N rows: fc2 -> BN -> ReLU -> fc3 -> BN -> ReLU -> fc4 ---
        def bn_eval(y, bn_ref):   # bn rows: [gamma, beta, running_mean, running_var]
            return ((y - bn_ref[2:3, :]) * lax.rsqrt(bn_ref[3:4, :] + BN_EPS)
                    * bn_ref[0:1, :] + bn_ref[1:2, :])

        h2 = hs_ref[...]                                     # (N, 128)
        y = (jnp.dot(h2.astype(bf16), fc2w_ref[...],
                     preferred_element_type=jnp.float32) + fc2b_ref[...])
        y = jnp.maximum(bn_eval(y, bn2_ref), 0.0)            # (N, 64); dropout2 identity
        z = (jnp.dot(y.astype(bf16), fc3w_ref[...],
                     preferred_element_type=jnp.float32) + fc3b_ref[...])
        z = jnp.maximum(bn_eval(z, bn3_ref), 0.0)            # (N, 16); dropout3 identity
        risk = (jnp.sum(z * fc4w_ref[...], axis=-1, keepdims=True)
                + fc4b_ref[...])                             # (N, 1) via VPU row-dot
        out_ref[...] = jnp.transpose(risk).reshape(1, 1, N)  # lane-row output

    return kernel


HEAD_PARAM_ORDER = ("b0", "w_hh0", "w_ih1", "w_hh1", "b1",
                    "fc2w", "fc2b", "bn2", "fc3w", "fc3b", "bn3", "fc4w", "fc4b")
_BF16_PARAMS = frozenset({"w_hh0", "w_ih1", "w_hh1", "fc2w", "fc3w"})


def wsi_survival_forward(x, params):
    """x: (B, N, C, H, W) float32 patches. Returns (risk (B, N, 1), None)."""
    B, N, C, H, W = x.shape
    P = C * H * W
    M = B * N
    vmem_limit = _vmem_limit_bytes()

    tm, M_pad = _tile_m(M)
    tp, P_pad = _tile_p(P)

    # ---- Kernel 1: patch embedding + attention score + W_ih0 projection ----
    x_flat = x.reshape(M, P).astype(jnp.bfloat16)
    if M_pad != M or P_pad != P:
        x_flat = jnp.pad(x_flat, ((0, M_pad - M), (0, P_pad - P)))
    w_enc = params["w_enc"].astype(jnp.bfloat16)
    if P_pad != P:
        w_enc = jnp.pad(w_enc, ((0, P_pad - P), (0, 0)))
    b_enc = params["b_enc"].astype(jnp.float32)
    w_att = params["w_att"].astype(jnp.float32)
    b_att = params["b_att"].astype(jnp.float32)
    w_ih0 = params["w_ih0"].astype(jnp.bfloat16)

    pg, sc = pl.pallas_call(
        _encoder_kernel,
        out_shape=(jax.ShapeDtypeStruct((M_pad, G4), jnp.float32),
                   jax.ShapeDtypeStruct((M_pad, 1), jnp.float32)),
        grid_spec=pltpu.PrefetchScalarGridSpec(
            num_scalar_prefetch=0,
            grid=(M_pad // tm, P_pad // tp),                  # reduction axis last
            in_specs=[pl.BlockSpec((tm, tp), lambda i, k: (i, k)),
                      pl.BlockSpec((tp, D_MODEL), lambda i, k: (k, 0)),
                      pl.BlockSpec((1, D_MODEL), lambda i, k: (0, 0)),
                      pl.BlockSpec((1, D_MODEL), lambda i, k: (0, 0)),
                      pl.BlockSpec((1, 1), lambda i, k: (0, 0)),
                      pl.BlockSpec((D_MODEL, G4), lambda i, k: (0, 0))],
            out_specs=[pl.BlockSpec((tm, G4), lambda i, k: (i, 0)),
                       pl.BlockSpec((tm, 1), lambda i, k: (i, 0))],
            scratch_shapes=[pltpu.VMEM((tm, D_MODEL), jnp.float32)]),
        compiler_params=pltpu.CompilerParams(
            dimension_semantics=("parallel", "arbitrary"),
            vmem_limit_bytes=vmem_limit),
    )(x_flat, w_enc, b_enc, w_att, b_att, w_ih0)

    pg = pg[:M].reshape(B, N, G4)
    sc = sc[:M].reshape(B, N, 1)

    # ---- Kernel 2: per-slide attention softmax + fused LSTM + MLP head ----
    def cast(name):
        arr = params[name]
        return arr.astype(jnp.bfloat16) if name in _BF16_PARAMS else arr.astype(jnp.float32)

    head_weights = [cast(name) for name in HEAD_PARAM_ORDER]

    def full_spec(arr):
        nd = arr.ndim
        return pl.BlockSpec(arr.shape, lambda b, _nd=nd: (0,) * _nd)

    out = pl.pallas_call(
        _make_head_kernel(N),
        out_shape=jax.ShapeDtypeStruct((B, 1, N), jnp.float32),
        grid_spec=pltpu.PrefetchScalarGridSpec(
            num_scalar_prefetch=0,
            grid=(B,),                                        # one slide per program
            in_specs=[pl.BlockSpec((1, N, G4), lambda b: (b, 0, 0)),
                      pl.BlockSpec((1, N, 1), lambda b: (b, 0, 0))]
                     + [full_spec(a) for a in head_weights],
            out_specs=pl.BlockSpec((1, 1, N), lambda b: (b, 0, 0)),
            scratch_shapes=[pltpu.VMEM((N, G4), jnp.float32),       # layer-0 input gates
                            pltpu.VMEM((N, H_LSTM), jnp.float32)]),  # layer-1 hidden history
        compiler_params=pltpu.CompilerParams(
            dimension_semantics=("parallel",),               # both TCs on v7x
            vmem_limit_bytes=vmem_limit),
    )(pg, sc, *head_weights)

    return jnp.transpose(out, (0, 2, 1)), None    # forward returns (x, None); (B, N, 1)


def init_params(key, patch_dim):
    """Deterministic synthetic parameters matching the module's shapes (f32 master copy)."""
    ks = jax.random.split(key, 18)

    def unif(k, shape, fan_in):
        b = 1.0 / np.sqrt(fan_in)
        return jax.random.uniform(k, shape, jnp.float32, -b, b)

    def bn_default(c):
        # PyTorch BatchNorm1d defaults: gamma=1, beta=0, running_mean=0, running_var=1
        return jnp.stack([jnp.ones((c,)), jnp.zeros((c,)),
                          jnp.zeros((c,)), jnp.ones((c,))]).astype(jnp.float32)

    return {
        "w_enc": unif(ks[0], (patch_dim, D_MODEL), patch_dim),
        "b_enc": unif(ks[1], (1, D_MODEL), patch_dim),
        "w_att": unif(ks[2], (1, D_MODEL), D_MODEL),      # row layout: scores via VPU dot
        "b_att": unif(ks[3], (1, 1), D_MODEL),
        # LSTM weights stored transposed ((in, 4H)) for lane-major matmuls;
        # PyTorch's b_ih + b_hh are pre-summed (mathematically identical).
        "w_ih0": unif(ks[4], (D_MODEL, G4), H_LSTM),
        "w_hh0": unif(ks[5], (H_LSTM, G4), H_LSTM),
        "b0": unif(ks[6], (1, G4), H_LSTM) + unif(ks[7], (1, G4), H_LSTM),
        "w_ih1": unif(ks[8], (H_LSTM, G4), H_LSTM),
        "w_hh1": unif(ks[9], (H_LSTM, G4), H_LSTM),
        "b1": unif(ks[10], (1, G4), H_LSTM) + unif(ks[11], (1, G4), H_LSTM),
        "fc2w": unif(ks[12], (H_LSTM, 64), H_LSTM),
        "fc2b": unif(ks[13], (1, 64), H_LSTM),
        "bn2": bn_default(64),
        "fc3w": unif(ks[14], (64, 16), 64),
        "fc3b": unif(ks[15], (1, 16), 64),
        "bn3": bn_default(16),
        "fc4w": unif(ks[16], (1, 16), 16),                # row layout for VPU final dot
        "fc4b": unif(ks[17], (1, 1), 16),
    }


def reference_forward(x, p):
    """Pure-JAX reference mirroring the kernel math (incl. bf16 casts / fold order)."""
    bf = jnp.bfloat16
    B, N = x.shape[0], x.shape[1]
    Hh = H_LSTM

    xf = x.reshape(B, N, -1).astype(bf)
    feat = jnp.tanh(
        jnp.einsum("bnp,pd->bnd", xf, p["w_enc"].astype(bf),
                   preferred_element_type=jnp.float32) + p["b_enc"])          # (B,N,768) f32

    scores = jnp.sum(feat * p["w_att"], axis=-1, keepdims=True) + p["b_att"][0, 0]
    attn = jax.nn.softmax(scores, axis=1)                                     # (B,N,1)
    pg = jnp.einsum("bnd,dg->bng", feat.astype(bf), p["w_ih0"].astype(bf),
                    preferred_element_type=jnp.float32)                       # (B,N,4H)
    xg = attn * pg + p["b0"]                                                  # fold order as kernel

    w_hh0 = p["w_hh0"].astype(bf); w_ih1 = p["w_ih1"].astype(bf); w_hh1 = p["w_hh1"].astype(bf)

    def sig(v):
        return 0.5 * (jnp.tanh(0.5 * v) + 1.0)

    def gates(g):
        return (sig(g[:, :Hh]), sig(g[:, Hh:2 * Hh]),
                jnp.tanh(g[:, 2 * Hh:3 * Hh]), sig(g[:, 3 * Hh:]))

    def step(carry, xt):                                  # xt: (B, 4H) pre-gates
        h0, c0, h1, c1 = carry
        g0 = xt + jnp.dot(h0.astype(bf), w_hh0, preferred_element_type=jnp.float32)
        i0, f0, gg0, o0 = gates(g0)
        c0 = f0 * c0 + i0 * gg0
        h0 = o0 * jnp.tanh(c0)
        g1 = (jnp.dot(h0.astype(bf), w_ih1, preferred_element_type=jnp.float32)
              + jnp.dot(h1.astype(bf), w_hh1, preferred_element_type=jnp.float32)
              + p["b1"])
        i1, f1, gg1, o1 = gates(g1)
        c1 = f1 * c1 + i1 * gg1
        h1 = o1 * jnp.tanh(c1)
        return (h0, c0, h1, c1), h1

    z0 = jnp.zeros((B, Hh), jnp.float32)
    _, hs = lax.scan(step, (z0, z0, z0, z0), jnp.swapaxes(xg, 0, 1))
    h2 = jnp.swapaxes(hs, 0, 1)                           # (B, N, 128)

    def bn(y, bnp):
        return (y - bnp[2]) * lax.rsqrt(bnp[3] + BN_EPS) * bnp[0] + bnp[1]

    y = jnp.maximum(bn(jnp.einsum("bnh,hk->bnk", h2.astype(bf), p["fc2w"].astype(bf),
                                  preferred_element_type=jnp.float32) + p["fc2b"],
                       p["bn2"]), 0.0)
    z = jnp.maximum(bn(jnp.einsum("bnk,kj->bnj", y.astype(bf), p["fc3w"].astype(bf),
                                  preferred_element_type=jnp.float32) + p["fc3b"],
                       p["bn3"]), 0.0)
    return jnp.sum(z * p["fc4w"], axis=-1, keepdims=True) + p["fc4b"][0, 0]   # (B,N,1)


if __name__ == "__main__":
    B, N, C, Hp, Wp = 2, 8, 3, 16, 16     # 2 slides, 8 patches each, 3x16x16 NCHW patches
    key = jax.random.PRNGKey(0)
    k_x, k_p = jax.random.split(key)
    x = jax.random.normal(k_x, (B, N, C, Hp, Wp), jnp.float32)
    params = init_params(k_p, C * Hp * Wp)

    out, aux = wsi_survival_forward(x, params)
    out = jax.block_until_ready(out)

    ref = reference_forward(x, params)
    assert out.shape == (B, N, 1) and aux is None
    assert np.all(np.isfinite(np.asarray(out)))
    # Tolerance covers bf16 MXU operand rounding + differing f32 accumulation
    # order between the tiled kernel and the single-shot XLA reference.
    max_err = float(np.max(np.abs(np.asarray(out) - np.asarray(ref))))
    assert max_err < 2e-2, f"mismatch vs JAX reference: {max_err}"
    print("KERNEL_OK")
</pallas_src>

<mosaic_0001>
module attributes {stable_mosaic.version = 11 : i64} {
  func.func @_encoder_kernel(%arg0: i32, %arg1: i32, %arg2: memref<16x256xbf16, #tpu.memory_space<vmem>>, %arg3: memref<256x768xbf16, #tpu.memory_space<vmem>>, %arg4: memref<1x768xf32, #tpu.memory_space<vmem>>, %arg5: memref<1x768xf32, #tpu.memory_space<vmem>>, %arg6: memref<1x1xf32, #tpu.memory_space<vmem>>, %arg7: memref<768x512xbf16, #tpu.memory_space<vmem>>, %arg8: memref<16x512xf32, #tpu.memory_space<vmem>>, %arg9: memref<16x1xf32, #tpu.memory_space<vmem>>, %arg10: memref<16x768xf32, #tpu.memory_space<vmem>>) attributes {dimension_semantics = [#tpu.dimension_semantics<parallel>, #tpu.dimension_semantics<arbitrary>], iteration_bounds = array<i64: 1, 3>, scalar_prefetch = 0 : i64, scratch_operands = 1 : i64, tpu.core_type = #tpu.core_type<tc>, window_params = [{transform_indices = @transform_0, window_bounds = array<i64: 16, 256>}, {transform_indices = @transform_1, window_bounds = array<i64: 256, 768>}, {pipeline_mode = #tpu.pipeline_mode<synchronous>, transform_indices = @transform_2, window_bounds = array<i64: 1, 768>}, {pipeline_mode = #tpu.pipeline_mode<synchronous>, transform_indices = @transform_3, window_bounds = array<i64: 1, 768>}, {pipeline_mode = #tpu.pipeline_mode<synchronous>, transform_indices = @transform_4, window_bounds = array<i64: 1, 1>}, {pipeline_mode = #tpu.pipeline_mode<synchronous>, transform_indices = @transform_5, window_bounds = array<i64: 768, 512>}, {transform_indices = @transform_6, window_bounds = array<i64: 16, 512>}, {transform_indices = @transform_7, window_bounds = array<i64: 16, 1>}]} {
    %c0_i32 = arith.constant 0 : i32
    %0 = arith.cmpi eq, %arg1, %c0_i32 : i32
    %1 = arith.extui %0 : i1 to i32
    %c0_i32_0 = arith.constant 0 : i32
    %2 = arith.cmpi ne, %1, %c0_i32_0 : i32
    scf.if %2 {
      %cst_9 = arith.constant 0.000000e+00 : f32
      %12 = vector.broadcast %cst_9 : f32 to vector<16x768xf32>
      %c0_10 = arith.constant 0 : index
      %c0_11 = arith.constant 0 : index
      %13 = vector.load %arg10[%c0_10, %c0_11] : memref<16x768xf32, #tpu.memory_space<vmem>>, vector<16x768xf32>
      tpu.vector_store %arg10[%c0_10, %c0_11], %12 {strides = array<i32>} : memref<16x768xf32, #tpu.memory_space<vmem>>, vector<16x768xf32>,
    } else {
    }
    %c0 = arith.constant 0 : index
    %c0_1 = arith.constant 0 : index
    %3 = vector.load %arg10[%c0, %c0_1] : memref<16x768xf32, #tpu.memory_space<vmem>>, vector<16x768xf32>
    %c0_2 = arith.constant 0 : index
    %c0_3 = arith.constant 0 : index
    %4 = vector.load %arg2[%c0_2, %c0_3] : memref<16x256xbf16, #tpu.memory_space<vmem>>, vector<16x256xbf16>
    %c0_4 = arith.constant 0 : index
    %c0_5 = arith.constant 0 : index
    %5 = vector.load %arg3[%c0_4, %c0_5] : memref<256x768xbf16, #tpu.memory_space<vmem>>, vector<256x768xbf16>
    %cst = arith.constant dense<0.000000e+00> : vector<16x768xf32>
    %6 = tpu.matmul %4, %5, %cst {dimension_numbers = #tpu.dot_dimension_numbers<[1], [0], [0], [1], [0, 0, 1, 1], [], []>} : vector<16x256xbf16>, vector<256x768xbf16>, vector<16x768xf32> -> vector<16x768xf32>
    %7 = arith.addf %3, %6 : vector<16x768xf32>
    %c0_6 = arith.constant 0 : index
    %c0_7 = arith.constant 0 : index
    %8 = vector.load %arg10[%c0_6, %c0_7] : memref<16x768xf32, #tpu.memory_space<vmem>>, vector<16x768xf32>
    tpu.vector_store %arg10[%c0_6, %c0_7], %7 {strides = array<i32>} : memref<16x768xf32, #tpu.memory_space<vmem>>, vector<16x768xf32>,
    %c2_i32 = arith.constant 2 : i32
    %9 = arith.cmpi eq, %arg1, %c2_i32 : i32
    %10 = arith.extui %9 : i1 to i32
    %c0_i32_8 = arith.constant 0 : i32
    %11 = arith.cmpi ne, %10, %c0_i32_8 : i32
    scf.if %11 {
      %c0_9 = arith.constant 0 : index
      %c0_10 = arith.constant 0 : index
      %12 = vector.load %arg10[%c0_9, %c0_10] : memref<16x768xf32, #tpu.memory_space<vmem>>, vector<16x768xf32>
      %c0_11 = arith.constant 0 : index
      %c0_12 = arith.constant 0 : index
      %13 = vector.load %arg4[%c0_11, %c0_12] : memref<1x768xf32, #tpu.memory_space<vmem>>, vector<1x768xf32>
      %14 = vector.broadcast %13 : vector<1x768xf32> to vector<16x768xf32>
      %15 = arith.addf %12, %14 : vector<16x768xf32>
      %16 = math.tanh %15 : vector<16x768xf32>
      %c0_13 = arith.constant 0 : index
      %c0_14 = arith.constant 0 : index
      %17 = vector.load %arg5[%c0_13, %c0_14] : memref<1x768xf32, #tpu.memory_space<vmem>>, vector<1x768xf32>
      %18 = vector.broadcast %17 : vector<1x768xf32> to vector<16x768xf32>
      %19 = arith.mulf %16, %18 : vector<16x768xf32>
      %cst_15 = arith.constant dense<0.000000e+00> : vector<16xf32>
      %20 = vector.multi_reduction <add>, %19, %cst_15 [1] : vector<16x768xf32> to vector<16xf32>
      %21 = vector.shape_cast %20 : vector<16xf32> to vector<16x1xf32>
      %c0_16 = arith.constant 0 : index
      %c0_17 = arith.constant 0 : index
      %22 = vector.load %arg6[%c0_16, %c0_17] : memref<1x1xf32, #tpu.memory_space<vmem>>, vector<1x1xf32>
      %23 = vector.broadcast %22 : vector<1x1xf32> to vector<16x1xf32>
      %24 = arith.addf %21, %23 : vector<16x1xf32>
      %c0_18 = arith.constant 0 : index
      %c0_19 = arith.constant 0 : index
      %25 = vector.load %arg9[%c0_18, %c0_19] : memref<16x1xf32, #tpu.memory_space<vmem>>, vector<16x1xf32>
      tpu.vector_store %arg9[%c0_18, %c0_19], %24 {strides = array<i32>} : memref<16x1xf32, #tpu.memory_space<vmem>>, vector<16x1xf32>,
      %26 = arith.truncf %16 : vector<16x768xf32> to vector<16x768xbf16>
      %c0_20 = arith.constant 0 : index
      %c0_21 = arith.constant 0 : index
      %27 = vector.load %arg7[%c0_20, %c0_21] : memref<768x512xbf16, #tpu.memory_space<vmem>>, vector<768x512xbf16>
      %cst_22 = arith.constant dense<0.000000e+00> : vector<16x512xf32>
      %28 = tpu.matmul %26, %27, %cst_22 {dimension_numbers = #tpu.dot_dimension_numbers<[1], [0], [0], [1], [0, 0, 1, 1], [], []>} : vector<16x768xbf16>, vector<768x512xbf16>, vector<16x512xf32> -> vector<16x512xf32>
      %c0_23 = arith.constant 0 : index
      %c0_24 = arith.constant 0 : index
      %29 = vector.load %arg8[%c0_23, %c0_24] : memref<16x512xf32, #tpu.memory_space<vmem>>, vector<16x512xf32>
      tpu.vector_store %arg8[%c0_23, %c0_24], %28 {strides = array<i32>} : memref<16x512xf32, #tpu.memory_space<vmem>>, vector<16x512xf32>,
    } else {
    }
    return
  }
  func.func @transform_0(%arg0: i32, %arg1: i32) -> (i32, i32) {
    %c0_i32 = arith.constant 0 : i32
    return %arg0, %arg1 : i32, i32
  }
  func.func @transform_1(%arg0: i32, %arg1: i32) -> (i32, i32) {
    %c0_i32 = arith.constant 0 : i32
    %c0_i32_0 = arith.constant 0 : i32
    return %arg1, %c0_i32 : i32, i32
  }
  func.func @transform_2(%arg0: i32, %arg1: i32) -> (i32, i32) {
    %c0_i32 = arith.constant 0 : i32
    %c0_i32_0 = arith.constant 0 : i32
    %c0_i32_1 = arith.constant 0 : i32
    return %c0_i32, %c0_i32_0 : i32, i32
  }
  func.func @transform_3(%arg0: i32, %arg1: i32) -> (i32, i32) {
    %c0_i32 = arith.constant 0 : i32
    %c0_i32_0 = arith.constant 0 : i32
    %c0_i32_1 = arith.constant 0 : i32
    return %c0_i32, %c0_i32_0 : i32, i32
  }
  func.func @transform_4(%arg0: i32, %arg1: i32) -> (i32, i32) {
    %c0_i32 = arith.constant 0 : i32
    %c0_i32_0 = arith.constant 0 : i32
    %c0_i32_1 = arith.constant 0 : i32
    return %c0_i32, %c0_i32_0 : i32, i32
  }
  func.func @transform_5(%arg0: i32, %arg1: i32) -> (i32, i32) {
    %c0_i32 = arith.constant 0 : i32
    %c0_i32_0 = arith.constant 0 : i32
    %c0_i32_1 = arith.constant 0 : i32
    return %c0_i32, %c0_i32_0 : i32, i32
  }
  func.func @transform_6(%arg0: i32, %arg1: i32) -> (i32, i32) {
    %c0_i32 = arith.constant 0 : i32
    %c0_i32_0 = arith.constant 0 : i32
    return %arg0, %c0_i32 : i32, i32
  }
  func.func @transform_7(%arg0: i32, %arg1: i32) -> (i32, i32) {
    %c0_i32 = arith.constant 0 : i32
    %c0_i32_0 = arith.constant 0 : i32
    return %arg0, %c0_i32 : i32, i32
  }
}

</mosaic_0001>

<llo_original>
// kernel: tpu_custom_call.1
$region0: #{tpu_custom_call.1}
  #allocation0 [shape = 'u32[]', space=smem, size = 0x4, offset = 0x4, fixed_abs, tag = 'smem constant byte address 0x4 - core index']
  #allocation1 [shape = 'u32[144,128]{1,0:T(1,128)}', space=vmem, size = 0x12000, scoped, tag = 'internal scratch']
  #allocation2 [shape = 'f32[16,768]{1,0:T(8,128)}', space=vmem, size = 0xc000, scoped, tag = 'scratch operand']
  #allocation3 [shape = 'f32[1,1]{1,0:T(1,128)S(1)}', space=vmem, size = 0x200, scoped, tag = 'scoped memory for tpu_custom_call.1']
  %s0 = inlined_call_operand.hbm [shape: bf16[16,768], index: 0, kind: input, shape index: {}]
  %s1 = inlined_call_operand.hbm [shape: bf16[768,768], index: 1, kind: input, shape index: {}]
  %s2 = inlined_call_operand.hbm [shape: f32[1,768], index: 2, kind: input, shape index: {}]
  %s3 = inlined_call_operand.hbm [shape: f32[1,768], index: 3, kind: input, shape index: {}]
  %s4 = inlined_call_operand.<no memory space> [shape: f32[1,1], index: 4, kind: input, shape index: {}]
  %s5 = inlined_call_operand.hbm [shape: bf16[768,512], index: 5, kind: input, shape index: {}]
  %s6 = inlined_call_operand.hbm [shape: f32[16,512], index: 6, kind: output, shape index: {0}]
  %s7 = inlined_call_operand.vmem [shape: f32[16,1], index: 7, kind: output, shape index: {1}]
  %8 = xla_tuple %s6, %s7
  %s9 = sld [smem:[#allocation0]]
  $region93: #{tpu_custom_call.1} parent=0
    _
  %s11 = ssub.s32 1, %s9
  %s12 = scalar_select 0, %s11, %s9
  %v13 = vstv %s4
  %14 = vst [vmem:[#allocation3] sm:$0x1] %v13
  $region1: #{tpu_custom_call.1} parent=0
    #allocation4 [shape = 'u8[16384]{0}', space=vmem, size = 0x4000, scoped, tag = 'input window, operand 0']
    #allocation5 [shape = 's32[2]{0}', space=sflag, size = 0x8, scoped, tag = 'scoped memory for tpu_custom_call.1']
    #allocation6 [shape = 's32[2]{0}', space=sflag, size = 0x8, scoped, tag = 'scoped memory for tpu_custom_call.1']
    #allocation7 [shape = 'u8[786432]{0}', space=vmem, size = 0xc0000, scoped, tag = 'input window, operand 1']
    #allocation8 [shape = 's32[2]{0}', space=sflag, size = 0x8, scoped, tag = 'scoped memory for tpu_custom_call.1']
    #allocation9 [shape = 'u8[3072]{0}', space=vmem, size = 0xc00, scoped, tag = 'input window, operand 2, single buffered']
    #allocation10 [shape = 'u8[3072]{0}', space=vmem, size = 0xc00, scoped, tag = 'input window, operand 3, single buffered']
    #allocation11 [shape = 's32[1]{0}', space=sflag, size = 0x4, scoped, tag = 'scoped memory for tpu_custom_call.1']
    #allocation12 [shape = 'u8[786432]{0}', space=vmem, size = 0xc0000, scoped, tag = 'input window, operand 5, single buffered']
    #allocation13 [shape = 'u8[32768]{0}', space=vmem, size = 0x8000, scoped, tag = 'output window, operand 0, single buffered']
    %15 = vsyncpa [#allocation5], 0
    %s16 = scalar_lea.sflag [#allocation5], 1
    %17 = vsyncpa %s16, 0
    %18 = vsyncpa [#allocation8], 0
    %s19 = scalar_lea.sflag [#allocation8], 1
    %20 = vsyncpa %s19, 0
    %21 = vsyncpa [#allocation11], 0
    %22 = vsyncpa [#allocation6], 0
    loop: start=0, step=1, limit=5
    $region2: #{tpu_custom_call.1} parent=1 // loop_pre_header
      _
    $region3: #{tpu_custom_call.1} parent=1 // loop_header
      %s24 = sphi 0, %s28
      %p25 = scmp.ge.s32.totalorder %s24, 5
      %s31 = sphi 0, %s43
      %s32 = sphi 0, %s39
      %s33 = sphi 0, %s31
      %s34 = sphi 0, %s32
      %s35 = sphi 0, %s33
      %s36 = sphi 0, %s34
      %s48 = sphi 0, %s50
      %s51 = sphi 0, %s48
      %s52 = sphi 0, %s51
      %s68 = sphi 0, %s52
      %s74 = sphi 0, %s76
      %s77 = sphi 0, %s74
      %s78 = sphi 0, %s77
      %s94 = sphi 0, %s78
      %s98 = sphi 0, %s98
      %s100 = sphi 0, %s98
      %s101 = sphi 0, %s100
      %s115 = sphi 0, %s101
      %s119 = sphi 0, %s119
      %s121 = sphi 0, %s119
      %s122 = sphi 0, %s121
      %s136 = sphi 0, %s122
      %s140 = sphi 0, %s140
      %s142 = sphi 0, %s140
      %s143 = sphi 0, %s142
      %s157 = sphi 0, %s143
      %s161 = sphi 0, %s161
      %s163 = sphi 0, %s161
      %s164 = sphi 0, %s163
      %s178 = sphi 0, %s164
      %s184 = sphi 0, %s186
      %s187 = sphi 0, %s184
      %s188 = sphi 0, %s187
      %s204 = sphi 0, %s188
      %s210 = sphi 0, %s212
      %s213 = sphi 0, %s210
      %s214 = sphi 0, %s213
      %s230 = sphi 0, %s214
    $region4: #{tpu_custom_call.1} parent=1 // loop_header_branch
      %27 = sbr.rel (%p25) target = $region8
    $region5: #{tpu_custom_call.1} parent=1 // loop_body
      %s29 = ssub.s32 %s24, 1
      %s30 = ssub.s32 %s24, 2
      %s37 = sadd.s32 1, %s32
      %p38 = scmp.ge.s32.totalorder %s37, 3
      %s39 = scalar_select %p38, 0, %s37
      %s40 = sadd.s32 1, %s31
      %s41 = scalar_select %p38, %s40, %s31
      %p42 = scmp.ge.s32.totalorder %s41, 1
      %s43 = scalar_select %p42, 0, %s41
      %s44 = ssub.s32 %s31, %s43
      %s45 = ssub.s32 %s32, %s39
      %s46 = sor.u32 %s44, %s45
      %p47 = scmp.eq.s32.totalorder %s46, 0
      %s49 = sadd.s32 %s48, 1
      %s50 = scalar_select %p47, %s48, %s49
      %p53 = pneg %p47
      %p54 = scmp.eq.s32.totalorder %s24, 2
      %p55 = por %p53, %p54
      %p56 = scmp.ne.s32.totalorder %s48, %s51
      %p57 = scmp.eq.s32.totalorder %s24, 0
      %p58 = por %p56, %p57
      %p59 = scmp.ne.s32.totalorder %s48, %s51
      %p60 = scmp.eq.s32.totalorder %s29, 2
      %p61 = por %p59, %p60
      %p62 = scmp.ne.s32.totalorder %s51, %s52
      %p63 = scmp.eq.s32.totalorder %s29, 0
      %p64 = por %p62, %p63
      %p65 = scmp.ne.s32.totalorder %s51, %s52
      %p66 = scmp.eq.s32.totalorder %s30, 2
      %p67 = por %p65, %p66
      %p69 = scmp.ne.s32.totalorder %s52, %s68
      %p70 = scmp.eq.s32.totalorder %s30, 0
      %p71 = por %p69, %p70
      %s72 = ssub.s32 %s32, %s39
      %p73 = scmp.eq.s32.totalorder %s72, 0
      %s75 = sadd.s32 %s74, 1
      %s76 = scalar_select %p73, %s74, %s75
      %p79 = pneg %p73
      %p80 = scmp.eq.s32.totalorder %s24, 2
      %p81 = por %p79, %p80
      %p82 = scmp.ne.s32.totalorder %s74, %s77
      %p83 = scmp.eq.s32.totalorder %s24, 0
      %p84 = por %p82, %p83
      %p85 = scmp.ne.s32.totalorder %s74, %s77
      %p86 = scmp.eq.s32.totalorder %s29, 2
      %p87 = por %p85, %p86
      %p88 = scmp.ne.s32.totalorder %s77, %s78
      %p89 = scmp.eq.s32.totalorder %s29, 0
      %p90 = por %p88, %p89
      %p91 = scmp.ne.s32.totalorder %s77, %s78
      %p92 = scmp.eq.s32.totalorder %s30, 2
      %p93 = por %p91, %p92
      %p95 = scmp.ne.s32.totalorder %s78, %s94
      %p96 = scmp.eq.s32.totalorder %s30, 0
      %p97 = por %p95, %p96
      %s99 = sadd.s32 %s98, 1
      %p102 = scmp.eq.s32.totalorder %s24, 2
      %p103 = scmp.ne.s32.totalorder %s98, %s100
      %p104 = scmp.eq.s32.totalorder %s24, 0
      %p105 = por %p103, %p104
      %p106 = scmp.ne.s32.totalorder %s98, %s100
      %p107 = scmp.eq.s32.totalorder %s29, 2
      %p108 = por %p106, %p107
      %p109 = scmp.ne.s32.totalorder %s100, %s101
      %p110 = scmp.eq.s32.totalorder %s29, 0
      %p111 = por %p109, %p110
      %p112 = scmp.ne.s32.totalorder %s100, %s101
      %p113 = scmp.eq.s32.totalorder %s30, 2
      %p114 = por %p112, %p113
      %p116 = scmp.ne.s32.totalorder %s101, %s115
      %p117 = scmp.eq.s32.totalorder %s30, 0
      %p118 = por %p116, %p117
      %s120 = sadd.s32 %s119, 1
      %p123 = scmp.eq.s32.totalorder %s24, 2
      %p124 = scmp.ne.s32.totalorder %s119, %s121
      %p125 = scmp.eq.s32.totalorder %s24, 0
      %p126 = por %p124, %p125
      %p127 = scmp.ne.s32.totalorder %s119, %s121
      %p128 = scmp.eq.s32.totalorder %s29, 2
      %p129 = por %p127, %p128
      %p130 = scmp.ne.s32.totalorder %s121, %s122
      %p131 = scmp.eq.s32.totalorder %s29, 0
      %p132 = por %p130, %p131
      %p133 = scmp.ne.s32.totalorder %s121, %s122
      %p134 = scmp.eq.s32.totalorder %s30, 2
      %p135 = por %p133, %p134
      %p137 = scmp.ne.s32.totalorder %s122, %s136
      %p138 = scmp.eq.s32.totalorder %s30, 0
      %p139 = por %p137, %p138
      %s141 = sadd.s32 %s140, 1
      %p144 = scmp.eq.s32.totalorder %s24, 2
      %p145 = scmp.ne.s32.totalorder %s140, %s142
      %p146 = scmp.eq.s32.totalorder %s24, 0
      %p147 = por %p145, %p146
      %p148 = scmp.ne.s32.totalorder %s140, %s142
      %p149 = scmp.eq.s32.totalorder %s29, 2
      %p150 = por %p148, %p149
      %p151 = scmp.ne.s32.totalorder %s142, %s143
      %p152 = scmp.eq.s32.totalorder %s29, 0
      %p153 = por %p151, %p152
      %p154 = scmp.ne.s32.totalorder %s142, %s143
      %p155 = scmp.eq.s32.totalorder %s30, 2
      %p156 = por %p154, %p155
      %p158 = scmp.ne.s32.totalorder %s143, %s157
      %p159 = scmp.eq.s32.totalorder %s30, 0
      %p160 = por %p158, %p159
      %s162 = sadd.s32 %s161, 1
      %p165 = scmp.eq.s32.totalorder %s24, 2
      %p166 = scmp.ne.s32.totalorder %s161, %s163
      %p167 = scmp.eq.s32.totalorder %s24, 0
      %p168 = por %p166, %p167
      %p169 = scmp.ne.s32.totalorder %s161, %s163
      %p170 = scmp.eq.s32.totalorder %s29, 2
      %p171 = por %p169, %p170
      %p172 = scmp.ne.s32.totalorder %s163, %s164
      %p173 = scmp.eq.s32.totalorder %s29, 0
      %p174 = por %p172, %p173
      %p175 = scmp.ne.s32.totalorder %s163, %s164
      %p176 = scmp.eq.s32.totalorder %s30, 2
      %p177 = por %p175, %p176
      %p179 = scmp.ne.s32.totalorder %s164, %s178
      %p180 = scmp.eq.s32.totalorder %s30, 0
      %p181 = por %p179, %p180
      %s182 = ssub.s32 %s31, %s43
      %p183 = scmp.eq.s32.totalorder %s182, 0
      %s185 = sadd.s32 %s184, 1
      %s186 = scalar_select %p183, %s184, %s185
      %p189 = pneg %p183
      %p190 = scmp.eq.s32.totalorder %s24, 2
      %p191 = por %p189, %p190
      %p192 = scmp.ne.s32.totalorder %s184, %s187
      %p193 = scmp.eq.s32.totalorder %s24, 0
      %p194 = por %p192, %p193
      %p195 = scmp.ne.s32.totalorder %s184, %s187
      %p196 = scmp.eq.s32.totalorder %s29, 2
      %p197 = por %p195, %p196
      %p198 = scmp.ne.s32.totalorder %s187, %s188
      %p199 = scmp.eq.s32.totalorder %s29, 0
      %p200 = por %p198, %p199
      %p201 = scmp.ne.s32.totalorder %s187, %s188
      %p202 = scmp.eq.s32.totalorder %s30, 2
      %p203 = por %p201, %p202
      %p205 = scmp.ne.s32.totalorder %s188, %s204
      %p206 = scmp.eq.s32.totalorder %s30, 0
      %p207 = por %p205, %p206
      %s208 = ssub.s32 %s31, %s43
      %p209 = scmp.eq.s32.totalorder %s208, 0
      %s211 = sadd.s32 %s210, 1
      %s212 = scalar_select %p209, %s210, %s211
      %p215 = pneg %p209
      %p216 = scmp.eq.s32.totalorder %s24, 2
      %p217 = por %p215, %p216
      %p218 = scmp.ne.s32.totalorder %s210, %s213
      %p219 = scmp.eq.s32.totalorder %s24, 0
      %p220 = por %p218, %p219
      %p221 = scmp.ne.s32.totalorder %s210, %s213
      %p222 = scmp.eq.s32.totalorder %s29, 2
      %p223 = por %p221, %p222
      %p224 = scmp.ne.s32.totalorder %s213, %s214
      %p225 = scmp.eq.s32.totalorder %s29, 0
      %p226 = por %p224, %p225
      %p227 = scmp.ne.s32.totalorder %s213, %s214
      %p228 = scmp.eq.s32.totalorder %s30, 2
      %p229 = por %p227, %p228
      %p231 = scmp.ne.s32.totalorder %s214, %s230
      %p232 = scmp.eq.s32.totalorder %s30, 0
      %p233 = por %p231, %p232
      %p234 = scmp.le.s32.totalorder 1, %s24
      %p235 = scmp.lt.s32.totalorder %s24, 4
      %p236 = pnand %p234, %p235
      %p237 = pneg %p236
      // Predicated region
      $region9: #{tpu_custom_call.1} parent=5 // pred_check
        _
      $region10: #{tpu_custom_call.1} parent=5 // pred_check_branch
        %239 = sbr.rel (%p236) target = $region12
      $region11: #{tpu_custom_call.1} parent=5 // pred_region
        %s240 = ssub.s32 %s24, 1
        // Predicated region
        $region13: #{tpu_custom_call.1} parent=11 // pred_check
          %p241 = pneg %p111
        $region14: #{tpu_custom_call.1} parent=11 // pred_check_branch
          %243 = sbr.rel (%p241) target = $region16
        $region15: #{tpu_custom_call.1} parent=11 // pred_region
          %s245 = ssub.s32 96, 96
          %246 = vsyncadd [#allocation8], %s245
          %s248 = sshll.u32 [#allocation9], 4
          %s249 = int_to_ptr.vmem [resolvable:$true] %s248
          %251 = dma.hbm_to_vmem [thread:$0]  %s2, 96, %s249, [#allocation8]
        $region16: #{tpu_custom_call.1} parent=11 // pred_fallthru
          _
        // Predicated region
        $region17: #{tpu_custom_call.1} parent=11 // pred_check
          %p252 = pneg %p132
        $region18: #{tpu_custom_call.1} parent=11 // pred_check_branch
          %254 = sbr.rel (%p252) target = $region20
        $region19: #{tpu_custom_call.1} parent=11 // pred_region
          %s256 = ssub.s32 96, 96
          %257 = vsyncadd [#allocation11], %s256
          %s259 = sshll.u32 [#allocation10], 4
          %s260 = int_to_ptr.vmem [resolvable:$true] %s259
          %262 = dma.hbm_to_vmem [thread:$0]  %s3, 96, %s260, [#allocation11]
        $region20: #{tpu_custom_call.1} parent=11 // pred_fallthru
          _
        // Predicated region
        $region21: #{tpu_custom_call.1} parent=11 // pred_check
          %p263 = pneg %p153
        $region22: #{tpu_custom_call.1} parent=11 // pred_check_branch
          %265 = sbr.rel (%p263) target = $region24
        $region23: #{tpu_custom_call.1} parent=11 // pred_region
          _
        $region24: #{tpu_custom_call.1} parent=11 // pred_fallthru
          _
        // Predicated region
        $region25: #{tpu_custom_call.1} parent=11 // pred_check
          %p266 = pneg %p174
        $region26: #{tpu_custom_call.1} parent=11 // pred_check_branch
          %268 = sbr.rel (%p266) target = $region28
        $region27: #{tpu_custom_call.1} parent=11 // pred_region
          %s270 = ssub.s32 24576, 24576
          %271 = vsyncadd [#allocation11], %s270
          %s272 = sshll.u32 [#allocation12], 4
          %s273 = int_to_ptr.vmem [resolvable:$true] %s272
          %278 = dma.hbm_to_vmem [thread:$0]  %s5, 24576, %s273, [#allocation11], 256, 256, 16
        $region28: #{tpu_custom_call.1} parent=11 // pred_fallthru
          _
      $region12: #{tpu_custom_call.1} parent=5 // pred_fallthru
        _
      %p279 = scmp.lt.s32.totalorder %s24, 3
      // Predicated region
      $region29: #{tpu_custom_call.1} parent=5 // pred_check
        %p280 = pneg %p279
      $region30: #{tpu_custom_call.1} parent=5 // pred_check_branch
        %282 = sbr.rel (%p280) target = $region32
      $region31: #{tpu_custom_call.1} parent=5 // pred_region
        // Predicated region
        $region33: #{tpu_custom_call.1} parent=31 // pred_check
          %p283 = pneg %p58
        $region34: #{tpu_custom_call.1} parent=31 // pred_check_branch
          %285 = sbr.rel (%p283) target = $region36
        $region35: #{tpu_custom_call.1} parent=31 // pred_region
          %s286 = sand.u32 %s48, 1
          %s287 = scalar_lea.sflag [#allocation5], %s286
          %s288 = sand.u32 %s48, 1
          %s289 = smul.addr %s288, 16
          %s290 = scalar_lea.vmem [#allocation4], %s289
          %s291 = smul.u32 2, %s31
          %s292 = smul.u32 2, %s32
          %s294 = ssub.s32 256, 256
          %295 = vsyncadd %s287, %s294
          %s296 = smul.addr %s291, 6
          %s297 = sadd.s32 %s292, %s296
          %s298 = smul.addr %s297, 64
          %s299 = scalar_lea.hbm %s0, %s298
          %s300 = sshll.u32 %s290, 4
          %s301 = int_to_ptr.vmem [resolvable:$true] %s300
          %306 = dma.hbm_to_vmem [thread:$0]  %s299, 256, %s301, %s287, 384, 128, 8
        $region36: #{tpu_custom_call.1} parent=31 // pred_fallthru
          _
        // Predicated region
        $region37: #{tpu_custom_call.1} parent=31 // pred_check
          %p307 = pneg %p84
        $region38: #{tpu_custom_call.1} parent=31 // pred_check_branch
          %309 = sbr.rel (%p307) target = $region40
        $region39: #{tpu_custom_call.1} parent=31 // pred_region
          %s310 = sand.u32 %s24, 1
          %s311 = scalar_lea.sflag [#allocation8], %s310
          %s312 = sand.u32 %s74, 1
          %s313 = smul.addr %s312, 768
          %s314 = scalar_lea.vmem [#allocation7], %s313
          %s315 = smul.u32 32, %s32
          %s317 = ssub.s32 12288, 12288
          %318 = vsyncadd %s311, %s317
          %s319 = smul.addr %s315, 6
          %s320 = smul.addr %s319, 64
          %s321 = scalar_lea.hbm %s1, %s320
          %s322 = sshll.u32 %s314, 4
          %s323 = int_to_ptr.vmem [resolvable:$true] %s322
          %328 = dma.hbm_to_vmem [thread:$0]  %s321, 12288, %s323, %s311, 384, 384, 24
        $region40: #{tpu_custom_call.1} parent=31 // pred_fallthru
          _
      $region32: #{tpu_custom_call.1} parent=5 // pred_fallthru
        _
      %p329 = scmp.le.s32.totalorder 1, %s24
      %p330 = scmp.lt.s32.totalorder %s24, 4
      %p331 = pnand %p329, %p330
      %p332 = pneg %p331
      // Predicated region
      $region41: #{tpu_custom_call.1} parent=5 // pred_check
        _
      $region42: #{tpu_custom_call.1} parent=5 // pred_check_branch
        %334 = sbr.rel (%p331) target = $region44
      $region43: #{tpu_custom_call.1} parent=5 // pred_region
        %s335 = ssub.s32 %s24, 1
        %s336 = sand.u32 %s51, 1
        %s337 = scalar_lea.sflag [#allocation5], %s336
        %s338 = sand.u32 %s51, 1
        %s339 = smul.addr %s338, 16
        %s340 = scalar_lea.vmem [#allocation4], %s339
        // Predicated region
        $region45: #{tpu_custom_call.1} parent=43 // pred_check
          %p341 = pneg %p64
        $region46: #{tpu_custom_call.1} parent=43 // pred_check_branch
          %343 = sbr.rel (%p341) target = $region48
        $region47: #{tpu_custom_call.1} parent=43 // pred_region
          %344 = dma.done %s337, 256
        $region48: #{tpu_custom_call.1} parent=43 // pred_fallthru
          _
        %s345 = sand.u32 %s29, 1
        %s346 = scalar_lea.sflag [#allocation8], %s345
        %s347 = sand.u32 %s77, 1
        %s348 = smul.addr %s347, 768
        %s349 = scalar_lea.vmem [#allocation7], %s348
        // Predicated region
        $region49: #{tpu_custom_call.1} parent=43 // pred_check
          %p350 = pneg %p90
        $region50: #{tpu_custom_call.1} parent=43 // pred_check_branch
          %352 = sbr.rel (%p350) target = $region52
        $region51: #{tpu_custom_call.1} parent=43 // pred_region
          %353 = dma.done %s346, 12288
        $region52: #{tpu_custom_call.1} parent=43 // pred_fallthru
          _
        // Predicated region
        $region53: #{tpu_custom_call.1} parent=43 // pred_check
          %p354 = pneg %p111
        $region54: #{tpu_custom_call.1} parent=43 // pred_check_branch
          %356 = sbr.rel (%p354) target = $region56
        $region55: #{tpu_custom_call.1} parent=43 // pred_region
          %357 = dma.done [#allocation8], 96
        $region56: #{tpu_custom_call.1} parent=43 // pred_fallthru
          _
        // Predicated region
        $region57: #{tpu_custom_call.1} parent=43 // pred_check
          %p358 = pneg %p132
        $region58: #{tpu_custom_call.1} parent=43 // pred_check_branch
          %360 = sbr.rel (%p358) target = $region60
        $region59: #{tpu_custom_call.1} parent=43 // pred_region
          %361 = dma.done [#allocation11], 96
        $region60: #{tpu_custom_call.1} parent=43 // pred_fallthru
          _
        // Predicated region
        $region61: #{tpu_custom_call.1} parent=43 // pred_check
          %p362 = pneg %p174
        $region62: #{tpu_custom_call.1} parent=43 // pred_check_branch
          %364 = sbr.rel (%p362) target = $region64
        $region63: #{tpu_custom_call.1} parent=43 // pred_region
          %365 = dma.done [#allocation11], 24576
        $region64: #{tpu_custom_call.1} parent=43 // pred_fallthru
          _
        %s366 = sand.u32 %s51, 1
        %s367 = scalar_lea.sflag [#allocation5], %s366
        %s368 = sand.u32 %s51, 1
        %s369 = smul.addr %s368, 16
        %s370 = scalar_lea.vmem [#allocation4], %s369
        %p371 = pneg %p64
        %p372 = pneg %p61
        %s373 = sand.u32 %s29, 1
        %s374 = scalar_lea.sflag [#allocation8], %s373
        %s375 = sand.u32 %s77, 1
        %s376 = smul.addr %s375, 768
        %s377 = scalar_lea.vmem [#allocation7], %s376
        %p378 = pneg %p90
        %p379 = pneg %p87
        %p380 = pneg %p111
        %p381 = pneg %p108
        %p382 = pneg %p132
        %p383 = pneg %p129
        %p384 = pneg %p153
        %p385 = pneg %p150
        %p386 = pneg %p174
        %p387 = pneg %p171
        %p388 = pneg %p200
        %p389 = pneg %p197
        %p390 = pneg %p226
        %p391 = pneg %p223
        %s392 = smul.u32 2, %s33
        %p393 = scmp.lt.s32.totalorder %s392, 1
        %s394 = scalar_select %p393, %s392, 1
        %s395 = smul.addr %s394, 8
        %s396 = scalar_lea.vmem %s7, %s395
        %s397 = smul.u32 2, %s33
        %s398 = smul.u32 2, %s34
        %s399 = smul.u32 32, %s34
        %s400 = smul.u32 2, %s33
        %s401 = smul.u32 2, %s33
        %p402 = scmp.lt.s32.totalorder %s401, 1
        %s403 = scalar_select %p402, %s401, 1
        %s404 = smul.addr %s403, 8
        %s405 = scalar_lea.vmem %s7, %s404
        %s406 = smul.u32 2, %s33
        %p407 = scmp.eq.s32.totalorder %s34, 0
        // Predicated region
        $region65: #{tpu_custom_call.1} parent=43 // pred_check
          %p408 = pneg %p407
        $region66: #{tpu_custom_call.1} parent=43 // pred_check_branch
          %410 = sbr.rel (%p408) target = $region68
        $region67: #{tpu_custom_call.1} parent=43 // pred_region
          %411 = vst [vmem:[#allocation2] sm:$0xff] 0.0
          %412 = vst [vmem:[#allocation2 + $0x8] sm:$0xff] 0.0
          %413 = vst [vmem:[#allocation2 + $0x10] sm:$0xff] 0.0
          %414 = vst [vmem:[#allocation2 + $0x18] sm:$0xff] 0.0
          %415 = vst [vmem:[#allocation2 + $0x20] sm:$0xff] 0.0
          %416 = vst [vmem:[#allocation2 + $0x28] sm:$0xff] 0.0
          %417 = vst [vmem:[#allocation2 + $0x30] sm:$0xff] 0.0
          %418 = vst [vmem:[#allocation2 + $0x38] sm:$0xff] 0.0
          %419 = vst [vmem:[#allocation2 + $0x40] sm:$0xff] 0.0
          %420 = vst [vmem:[#allocation2 + $0x48] sm:$0xff] 0.0
          %421 = vst [vmem:[#allocation2 + $0x50] sm:$0xff] 0.0
          %422 = vst [vmem:[#allocation2 + $0x58] sm:$0xff] 0.0
        $region68: #{tpu_custom_call.1} parent=43 // pred_fallthru
          _
        %v423 = vld [vmem:[#allocation2] sm:$0xff]
        %v424 = vld [vmem:[#allocation2 + $0x8] sm:$0xff]
        %v425 = vld [vmem:[#allocation2 + $0x10] sm:$0xff]
        %v426 = vld [vmem:[#allocation2 + $0x18] sm:$0xff]
        %v427 = vld [vmem:[#allocation2 + $0x20] sm:$0xff]
        %v428 = vld [vmem:[#allocation2 + $0x28] sm:$0xff]
        %v429 = vld [vmem:[#allocation2 + $0x30] sm:$0xff]
        %v430 = vld [vmem:[#allocation2 + $0x38] sm:$0xff]
        %v431 = vld [vmem:[#allocation2 + $0x40] sm:$0xff]
        %v432 = vld [vmem:[#allocation2 + $0x48] sm:$0xff]
        %v433 = vld [vmem:[#allocation2 + $0x50] sm:$0xff]
        %v434 = vld [vmem:[#allocation2 + $0x58] sm:$0xff]
        %v435 = vld [vmem:[%s340] sm:$0xff]
        %v436 = vld [vmem:[%s340 + $0x8] sm:$0xff]
        %v437 = vld [vmem:[%s349] sm:$0xff]
        %v438 = vld [vmem:[%s349 + $0x8] sm:$0xff]
        %v439 = vld [vmem:[%s349 + $0x10] sm:$0xff]
        %v440 = vld [vmem:[%s349 + $0x18] sm:$0xff]
        %v441 = vld [vmem:[%s349 + $0x20] sm:$0xff]
        %v442 = vld [vmem:[%s349 + $0x28] sm:$0xff]
        %v443 = vld [vmem:[%s349 + $0x30] sm:$0xff]
        %v444 = vld [vmem:[%s349 + $0x38] sm:$0xff]
        %v445 = vld [vmem:[%s349 + $0x40] sm:$0xff]
        %v446 = vld [vmem:[%s349 + $0x48] sm:$0xff]
        %v447 = vld [vmem:[%s349 + $0x50] sm:$0xff]
        %v448 = vld [vmem:[%s349 + $0x58] sm:$0xff]
        %v449 = vld [vmem:[%s349 + $0x60] sm:$0xff]
        %v450 = vld [vmem:[%s349 + $0x68] sm:$0xff]
        %v451 = vld [vmem:[%s349 + $0x70] sm:$0xff]
        %v452 = vld [vmem:[%s349 + $0x78] sm:$0xff]
        %v453 = vld [vmem:[%s349 + $0x80] sm:$0xff]
        %v454 = vld [vmem:[%s349 + $0x88] sm:$0xff]
        %v455 = vld [vmem:[%s349 + $0x90] sm:$0xff]
        %v456 = vld [vmem:[%s349 + $0x98] sm:$0xff]
        %v457 = vld [vmem:[%s349 + $0xa0] sm:$0xff]
        %v458 = vld [vmem:[%s349 + $0xa8] sm:$0xff]
        %v459 = vld [vmem:[%s349 + $0xb0] sm:$0xff]
        %v460 = vld [vmem:[%s349 + $0xb8] sm:$0xff]
        %v461 = vld [vmem:[%s349 + $0xc0] sm:$0xff]
        %v462 = vld [vmem:[%s349 + $0xc8] sm:$0xff]
        %v463 = vld [vmem:[%s349 + $0xd0] sm:$0xff]
        %v464 = vld [vmem:[%s349 + $0xd8] sm:$0xff]
        %v465 = vld [vmem:[%s349 + $0xe0] sm:$0xff]
        %v466 = vld [vmem:[%s349 + $0xe8] sm:$0xff]
        %v467 = vld [vmem:[%s349 + $0xf0] sm:$0xff]
        %v468 = vld [vmem:[%s349 + $0xf8] sm:$0xff]
        %v469 = vld [vmem:[%s349 + $0x100] sm:$0xff]
        %v470 = vld [vmem:[%s349 + $0x108] sm:$0xff]
        %v471 = vld [vmem:[%s349 + $0x110] sm:$0xff]
        %v472 = vld [vmem:[%s349 + $0x118] sm:$0xff]
        %v473 = vld [vmem:[%s349 + $0x120] sm:$0xff]
        %v474 = vld [vmem:[%s349 + $0x128] sm:$0xff]
        %v475 = vld [vmem:[%s349 + $0x130] sm:$0xff]
        %v476 = vld [vmem:[%s349 + $0x138] sm:$0xff]
        %v477 = vld [vmem:[%s349 + $0x140] sm:$0xff]
        %v478 = vld [vmem:[%s349 + $0x148] sm:$0xff]
        %v479 = vld [vmem:[%s349 + $0x150] sm:$0xff]
        %v480 = vld [vmem:[%s349 + $0x158] sm:$0xff]
        %v481 = vld [vmem:[%s349 + $0x160] sm:$0xff]
        %v482 = vld [vmem:[%s349 + $0x168] sm:$0xff]
        %v483 = vld [vmem:[%s349 + $0x170] sm:$0xff]
        %v484 = vld [vmem:[%s349 + $0x178] sm:$0xff]
        %v485 = vld [vmem:[%s349 + $0x180] sm:$0xff]
        %v486 = vld [vmem:[%s349 + $0x188] sm:$0xff]
        %v487 = vld [vmem:[%s349 + $0x190] sm:$0xff]
        %v488 = vld [vmem:[%s349 + $0x198] sm:$0xff]
        %v489 = vld [vmem:[%s349 + $0x1a0] sm:$0xff]
        %v490 = vld [vmem:[%s349 + $0x1a8] sm:$0xff]
        %v491 = vld [vmem:[%s349 + $0x1b0] sm:$0xff]
        %v492 = vld [vmem:[%s349 + $0x1b8] sm:$0xff]
        %v493 = vld [vmem:[%s349 + $0x1c0] sm:$0xff]
        %v494 = vld [vmem:[%s349 + $0x1c8] sm:$0xff]
        %v495 = vld [vmem:[%s349 + $0x1d0] sm:$0xff]
        %v496 = vld [vmem:[%s349 + $0x1d8] sm:$0xff]
        %v497 = vld [vmem:[%s349 + $0x1e0] sm:$0xff]
        %v498 = vld [vmem:[%s349 + $0x1e8] sm:$0xff]
        %v499 = vld [vmem:[%s349 + $0x1f0] sm:$0xff]
        %v500 = vld [vmem:[%s349 + $0x1f8] sm:$0xff]
        %v501 = vld [vmem:[%s349 + $0x200] sm:$0xff]
        %v502 = vld [vmem:[%s349 + $0x208] sm:$0xff]
        %v503 = vld [vmem:[%s349 + $0x210] sm:$0xff]
        %v504 = vld [vmem:[%s349 + $0x218] sm:$0xff]
        %v505 = vld [vmem:[%s349 + $0x220] sm:$0xff]
        %v506 = vld [vmem:[%s349 + $0x228] sm:$0xff]
        %v507 = vld [vmem:[%s349 + $0x230] sm:$0xff]
        %v508 = vld [vmem:[%s349 + $0x238] sm:$0xff]
        %v509 = vld [vmem:[%s349 + $0x240] sm:$0xff]
        %v510 = vld [vmem:[%s349 + $0x248] sm:$0xff]
        %v511 = vld [vmem:[%s349 + $0x250] sm:$0xff]
        %v512 = vld [vmem:[%s349 + $0x258] sm:$0xff]
        %v513 = vld [vmem:[%s349 + $0x260] sm:$0xff]
        %v514 = vld [vmem:[%s349 + $0x268] sm:$0xff]
        %v515 = vld [vmem:[%s349 + $0x270] sm:$0xff]
        %v516 = vld [vmem:[%s349 + $0x278] sm:$0xff]
        %v517 = vld [vmem:[%s349 + $0x280] sm:$0xff]
        %v518 = vld [vmem:[%s349 + $0x288] sm:$0xff]
        %v519 = vld [vmem:[%s349 + $0x290] sm:$0xff]
        %v520 = vld [vmem:[%s349 + $0x298] sm:$0xff]
        %v521 = vld [vmem:[%s349 + $0x2a0] sm:$0xff]
        %v522 = vld [vmem:[%s349 + $0x2a8] sm:$0xff]
        %v523 = vld [vmem:[%s349 + $0x2b0] sm:$0xff]
        %v524 = vld [vmem:[%s349 + $0x2b8] sm:$0xff]
        %v525 = vld [vmem:[%s349 + $0x2c0] sm:$0xff]
        %v526 = vld [vmem:[%s349 + $0x2c8] sm:$0xff]
        %v527 = vld [vmem:[%s349 + $0x2d0] sm:$0xff]
        %v528 = vld [vmem:[%s349 + $0x2d8] sm:$0xff]
        %v529 = vld [vmem:[%s349 + $0x2e0] sm:$0xff]
        %v530 = vld [vmem:[%s349 + $0x2e8] sm:$0xff]
        %v531 = vld [vmem:[%s349 + $0x2f0] sm:$0xff]
        %v532 = vld [vmem:[%s349 + $0x2f8] sm:$0xff]
        %v535 = vunpack.c.l.b16 %v435
        %v536 = vunpack.c.h.b16 %v435
        %v537 = vunpack.c.l.b16 %v436
        %v538 = vunpack.c.h.b16 %v436
        %v539 = vpack.c.b16 %v537, %v535
        %v540 = vpack.c.b16 %v538, %v536
        %v639 = vunpack.c.l.b16 %v437
        %v640 = vunpack.c.h.b16 %v437
        %v641 = vunpack.c.l.b16 %v438
        %v642 = vunpack.c.h.b16 %v438
        %v643 = vunpack.c.l.b16 %v439
        %v644 = vunpack.c.h.b16 %v439
        %v645 = vunpack.c.l.b16 %v440
        %v646 = vunpack.c.h.b16 %v440
        %v647 = vunpack.c.l.b16 %v441
        %v648 = vunpack.c.h.b16 %v441
        %v649 = vunpack.c.l.b16 %v442
        %v650 = vunpack.c.h.b16 %v442
        %v651 = vunpack.c.l.b16 %v443
        %v652 = vunpack.c.h.b16 %v443
        %v653 = vunpack.c.l.b16 %v444
        %v654 = vunpack.c.h.b16 %v444
        %v655 = vunpack.c.l.b16 %v445
        %v656 = vunpack.c.h.b16 %v445
        %v657 = vunpack.c.l.b16 %v446
        %v658 = vunpack.c.h.b16 %v446
        %v659 = vunpack.c.l.b16 %v447
        %v660 = vunpack.c.h.b16 %v447
        %v661 = vunpack.c.l.b16 %v448
        %v662 = vunpack.c.h.b16 %v448
        %v663 = vunpack.c.l.b16 %v449
        %v664 = vunpack.c.h.b16 %v449
        %v665 = vunpack.c.l.b16 %v450
        %v666 = vunpack.c.h.b16 %v450
        %v667 = vunpack.c.l.b16 %v451
        %v668 = vunpack.c.h.b16 %v451
        %v669 = vunpack.c.l.b16 %v452
        %v670 = vunpack.c.h.b16 %v452
        %v671 = vunpack.c.l.b16 %v453
        %v672 = vunpack.c.h.b16 %v453
        %v673 = vunpack.c.l.b16 %v454
        %v674 = vunpack.c.h.b16 %v454
        %v675 = vunpack.c.l.b16 %v455
        %v676 = vunpack.c.h.b16 %v455
        %v677 = vunpack.c.l.b16 %v456
        %v678 = vunpack.c.h.b16 %v456
        %v679 = vunpack.c.l.b16 %v457
        %v680 = vunpack.c.h.b16 %v457
        %v681 = vunpack.c.l.b16 %v458
        %v682 = vunpack.c.h.b16 %v458
        %v683 = vunpack.c.l.b16 %v459
        %v684 = vunpack.c.h.b16 %v459
        %v685 = vunpack.c.l.b16 %v460
        %v686 = vunpack.c.h.b16 %v460
        %v687 = vunpack.c.l.b16 %v461
        %v688 = vunpack.c.h.b16 %v461
        %v689 = vunpack.c.l.b16 %v462
        %v690 = vunpack.c.h.b16 %v462
        %v691 = vunpack.c.l.b16 %v463
        %v692 = vunpack.c.h.b16 %v463
        %v693 = vunpack.c.l.b16 %v464
        %v694 = vunpack.c.h.b16 %v464
        %v695 = vunpack.c.l.b16 %v465
        %v696 = vunpack.c.h.b16 %v465
        %v697 = vunpack.c.l.b16 %v466
        %v698 = vunpack.c.h.b16 %v466
        %v699 = vunpack.c.l.b16 %v467
        %v700 = vunpack.c.h.b16 %v467
        %v701 = vunpack.c.l.b16 %v468
        %v702 = vunpack.c.h.b16 %v468
        %v703 = vunpack.c.l.b16 %v469
        %v704 = vunpack.c.h.b16 %v469
        %v705 = vunpack.c.l.b16 %v470
        %v706 = vunpack.c.h.b16 %v470
        %v707 = vunpack.c.l.b16 %v471
        %v708 = vunpack.c.h.b16 %v471
        %v709 = vunpack.c.l.b16 %v472
        %v710 = vunpack.c.h.b16 %v472
        %v711 = vunpack.c.l.b16 %v473
        %v712 = vunpack.c.h.b16 %v473
        %v713 = vunpack.c.l.b16 %v474
        %v714 = vunpack.c.h.b16 %v474
        %v715 = vunpack.c.l.b16 %v475
        %v716 = vunpack.c.h.b16 %v475
        %v717 = vunpack.c.l.b16 %v476
        %v718 = vunpack.c.h.b16 %v476
        %v719 = vunpack.c.l.b16 %v477
        %v720 = vunpack.c.h.b16 %v477
        %v721 = vunpack.c.l.b16 %v478
        %v722 = vunpack.c.h.b16 %v478
        %v723 = vunpack.c.l.b16 %v479
        %v724 = vunpack.c.h.b16 %v479
        %v725 = vunpack.c.l.b16 %v480
        %v726 = vunpack.c.h.b16 %v480
        %v727 = vunpack.c.l.b16 %v481
        %v728 = vunpack.c.h.b16 %v481
        %v729 = vunpack.c.l.b16 %v482
        %v730 = vunpack.c.h.b16 %v482
        %v731 = vunpack.c.l.b16 %v483
        %v732 = vunpack.c.h.b16 %v483
        %v733 = vunpack.c.l.b16 %v484
        %v734 = vunpack.c.h.b16 %v484
        %v735 = vunpack.c.l.b16 %v485
        %v736 = vunpack.c.h.b16 %v485
        %v737 = vunpack.c.l.b16 %v486
        %v738 = vunpack.c.h.b16 %v486
        %v739 = vunpack.c.l.b16 %v487
        %v740 = vunpack.c.h.b16 %v487
        %v741 = vunpack.c.l.b16 %v488
        %v742 = vunpack.c.h.b16 %v488
        %v743 = vunpack.c.l.b16 %v489
        %v744 = vunpack.c.h.b16 %v489
        %v745 = vunpack.c.l.b16 %v490
        %v746 = vunpack.c.h.b16 %v490
        %v747 = vunpack.c.l.b16 %v491
        %v748 = vunpack.c.h.b16 %v491
        %v749 = vunpack.c.l.b16 %v492
        %v750 = vunpack.c.h.b16 %v492
        %v751 = vunpack.c.l.b16 %v493
        %v752 = vunpack.c.h.b16 %v493
        %v753 = vunpack.c.l.b16 %v494
        %v754 = vunpack.c.h.b16 %v494
        %v755 = vunpack.c.l.b16 %v495
        %v756 = vunpack.c.h.b16 %v495
        %v757 = vunpack.c.l.b16 %v496
        %v758 = vunpack.c.h.b16 %v496
        %v759 = vunpack.c.l.b16 %v497
        %v760 = vunpack.c.h.b16 %v497
        %v761 = vunpack.c.l.b16 %v498
        %v762 = vunpack.c.h.b16 %v498
        %v763 = vunpack.c.l.b16 %v499
        %v764 = vunpack.c.h.b16 %v499
        %v765 = vunpack.c.l.b16 %v500
        %v766 = vunpack.c.h.b16 %v500
        %v767 = vunpack.c.l.b16 %v501
        %v768 = vunpack.c.h.b16 %v501
        %v769 = vunpack.c.l.b16 %v502
        %v770 = vunpack.c.h.b16 %v502
        %v771 = vunpack.c.l.b16 %v503
        %v772 = vunpack.c.h.b16 %v503
        %v773 = vunpack.c.l.b16 %v504
        %v774 = vunpack.c.h.b16 %v504
        %v775 = vunpack.c.l.b16 %v505
        %v776 = vunpack.c.h.b16 %v505
        %v777 = vunpack.c.l.b16 %v506
        %v778 = vunpack.c.h.b16 %v506
        %v779 = vunpack.c.l.b16 %v507
        %v780 = vunpack.c.h.b16 %v507
        %v781 = vunpack.c.l.b16 %v508
        %v782 = vunpack.c.h.b16 %v508
        %v783 = vunpack.c.l.b16 %v509
        %v784 = vunpack.c.h.b16 %v509
        %v785 = vunpack.c.l.b16 %v510
        %v786 = vunpack.c.h.b16 %v510
        %v787 = vunpack.c.l.b16 %v511
        %v788 = vunpack.c.h.b16 %v511
        %v789 = vunpack.c.l.b16 %v512
        %v790 = vunpack.c.h.b16 %v512
        %v791 = vunpack.c.l.b16 %v513
        %v792 = vunpack.c.h.b16 %v513
        %v793 = vunpack.c.l.b16 %v514
        %v794 = vunpack.c.h.b16 %v514
        %v795 = vunpack.c.l.b16 %v515
        %v796 = vunpack.c.h.b16 %v515
        %v797 = vunpack.c.l.b16 %v516
        %v798 = vunpack.c.h.b16 %v516
        %v799 = vunpack.c.l.b16 %v517
        %v800 = vunpack.c.h.b16 %v517
        %v801 = vunpack.c.l.b16 %v518
        %v802 = vunpack.c.h.b16 %v518
        %v803 = vunpack.c.l.b16 %v519
        %v804 = vunpack.c.h.b16 %v519
        %v805 = vunpack.c.l.b16 %v520
        %v806 = vunpack.c.h.b16 %v520
        %v807 = vunpack.c.l.b16 %v521
        %v808 = vunpack.c.h.b16 %v521
        %v809 = vunpack.c.l.b16 %v522
        %v810 = vunpack.c.h.b16 %v522
        %v811 = vunpack.c.l.b16 %v523
        %v812 = vunpack.c.h.b16 %v523
        %v813 = vunpack.c.l.b16 %v524
        %v814 = vunpack.c.h.b16 %v524
        %v815 = vunpack.c.l.b16 %v525
        %v816 = vunpack.c.h.b16 %v525
        %v817 = vunpack.c.l.b16 %v526
        %v818 = vunpack.c.h.b16 %v526
        %v819 = vunpack.c.l.b16 %v527
        %v820 = vunpack.c.h.b16 %v527
        %v821 = vunpack.c.l.b16 %v528
        %v822 = vunpack.c.h.b16 %v528
        %v823 = vunpack.c.l.b16 %v529
        %v824 = vunpack.c.h.b16 %v529
        %v825 = vunpack.c.l.b16 %v530
        %v826 = vunpack.c.h.b16 %v530
        %v827 = vunpack.c.l.b16 %v531
        %v828 = vunpack.c.h.b16 %v531
        %v829 = vunpack.c.l.b16 %v532
        %v830 = vunpack.c.h.b16 %v532
        %v831 = vpack.c.b16 %v645, %v639
        %v832 = vpack.c.b16 %v646, %v640
        %v833 = vpack.c.b16 %v647, %v641
        %v834 = vpack.c.b16 %v648, %v642
        %v835 = vpack.c.b16 %v649, %v643
        %v836 = vpack.c.b16 %v650, %v644
        %v837 = vpack.c.b16 %v657, %v651
        %v838 = vpack.c.b16 %v658, %v652
        %v839 = vpack.c.b16 %v659, %v653
        %v840 = vpack.c.b16 %v660, %v654
        %v841 = vpack.c.b16 %v661, %v655
        %v842 = vpack.c.b16 %v662, %v656
        %v843 = vpack.c.b16 %v669, %v663
        %v844 = vpack.c.b16 %v670, %v664
        %v845 = vpack.c.b16 %v671, %v665
        %v846 = vpack.c.b16 %v672, %v666
        %v847 = vpack.c.b16 %v673, %v667
        %v848 = vpack.c.b16 %v674, %v668
        %v849 = vpack.c.b16 %v681, %v675
        %v850 = vpack.c.b16 %v682, %v676
        %v851 = vpack.c.b16 %v683, %v677
        %v852 = vpack.c.b16 %v684, %v678
        %v853 = vpack.c.b16 %v685, %v679
        %v854 = vpack.c.b16 %v686, %v680
        %v855 = vpack.c.b16 %v693, %v687
        %v856 = vpack.c.b16 %v694, %v688
        %v857 = vpack.c.b16 %v695, %v689
        %v858 = vpack.c.b16 %v696, %v690
        %v859 = vpack.c.b16 %v697, %v691
        %v860 = vpack.c.b16 %v698, %v692
        %v861 = vpack.c.b16 %v705, %v699
        %v862 = vpack.c.b16 %v706, %v700
        %v863 = vpack.c.b16 %v707, %v701
        %v864 = vpack.c.b16 %v708, %v702
        %v865 = vpack.c.b16 %v709, %v703
        %v866 = vpack.c.b16 %v710, %v704
        %v867 = vpack.c.b16 %v717, %v711
        %v868 = vpack.c.b16 %v718, %v712
        %v869 = vpack.c.b16 %v719, %v713
        %v870 = vpack.c.b16 %v720, %v714
        %v871 = vpack.c.b16 %v721, %v715
        %v872 = vpack.c.b16 %v722, %v716
        %v873 = vpack.c.b16 %v729, %v723
        %v874 = vpack.c.b16 %v730, %v724
        %v875 = vpack.c.b16 %v731, %v725
        %v876 = vpack.c.b16 %v732, %v726
        %v877 = vpack.c.b16 %v733, %v727
        %v878 = vpack.c.b16 %v734, %v728
        %v879 = vpack.c.b16 %v741, %v735
        %v880 = vpack.c.b16 %v742, %v736
        %v881 = vpack.c.b16 %v743, %v737
        %v882 = vpack.c.b16 %v744, %v738
        %v883 = vpack.c.b16 %v745, %v739
        %v884 = vpack.c.b16 %v746, %v740
        %v885 = vpack.c.b16 %v753, %v747
        %v886 = vpack.c.b16 %v754, %v748
        %v887 = vpack.c.b16 %v755, %v749
        %v888 = vpack.c.b16 %v756, %v750
        %v889 = vpack.c.b16 %v757, %v751
        %v890 = vpack.c.b16 %v758, %v752
        %v891 = vpack.c.b16 %v765, %v759
        %v892 = vpack.c.b16 %v766, %v760
        %v893 = vpack.c.b16 %v767, %v761
        %v894 = vpack.c.b16 %v768, %v762
        %v895 = vpack.c.b16 %v769, %v763
        %v896 = vpack.c.b16 %v770, %v764
        %v897 = vpack.c.b16 %v777, %v771
        %v898 = vpack.c.b16 %v778, %v772
        %v899 = vpack.c.b16 %v779, %v773
        %v900 = vpack.c.b16 %v780, %v774
        %v901 = vpack.c.b16 %v781, %v775
        %v902 = vpack.c.b16 %v782, %v776
        %v903 = vpack.c.b16 %v789, %v783
        %v904 = vpack.c.b16 %v790, %v784
        %v905 = vpack.c.b16 %v791, %v785
        %v906 = vpack.c.b16 %v792, %v786
        %v907 = vpack.c.b16 %v793, %v787
        %v908 = vpack.c.b16 %v794, %v788
        %v909 = vpack.c.b16 %v801, %v795
        %v910 = vpack.c.b16 %v802, %v796
        %v911 = vpack.c.b16 %v803, %v797
        %v912 = vpack.c.b16 %v804, %v798
        %v913 = vpack.c.b16 %v805, %v799
        %v914 = vpack.c.b16 %v806, %v800
        %v915 = vpack.c.b16 %v813, %v807
        %v916 = vpack.c.b16 %v814, %v808
        %v917 = vpack.c.b16 %v815, %v809
        %v918 = vpack.c.b16 %v816, %v810
        %v919 = vpack.c.b16 %v817, %v811
        %v920 = vpack.c.b16 %v818, %v812
        %v921 = vpack.c.b16 %v825, %v819
        %v922 = vpack.c.b16 %v826, %v820
        %v923 = vpack.c.b16 %v827, %v821
        %v924 = vpack.c.b16 %v828, %v822
        %v925 = vpack.c.b16 %v829, %v823
        %v926 = vpack.c.b16 %v830, %v824
        %1023 = vmatprep.subr.bf16.mxu0 %v832
        %1024 = vmatpush1.bf16.msra.mxu0 %v831
        %1025 = vmatprep.subr.bf16.mxu0 %v838
        %1026 = vmatpush1.bf16.msra.mxu0 %v837
        %1027 = vmatprep.subr.bf16.mxu0 %v844
        %1028 = vmatpush1.bf16.msra.mxu0 %v843
        %1029 = vmatprep.subr.bf16.mxu0 %v850
        %1030 = vmatpush1.bf16.msra.mxu0 %v849
        %1031 = vmatprep.subr.bf16.mxu0 %v856
        %1032 = vmatpush1.bf16.msra.mxu0 %v855
        %1033 = vmatprep.subr.bf16.mxu0 %v862
        %1034 = vmatpush1.bf16.msra.mxu0 %v861
        %1035 = vmatprep.subr.bf16.mxu0 %v868
        %1036 = vmatpush1.bf16.msra.mxu0 %v867
        %1037 = vmatprep.subr.bf16.mxu0 %v874
        %1038 = vmatpush1.bf16.msra.mxu0 %v873
        %1039 = vmatprep.subr.bf16.mxu0 %v880
        %1040 = vmatpush1.bf16.msra.mxu0 %v879
        %1041 = vmatprep.subr.bf16.mxu0 %v886
        %1042 = vmatpush1.bf16.msra.mxu0 %v885
        %1043 = vmatprep.subr.bf16.mxu0 %v892
        %1044 = vmatpush1.bf16.msra.mxu0 %v891
        %1045 = vmatprep.subr.bf16.mxu0 %v898
        %1046 = vmatpush1.bf16.msra.mxu0 %v897
        %1047 = vmatprep.subr.bf16.mxu0 %v904
        %1048 = vmatpush1.bf16.msra.mxu0 %v903
        %1049 = vmatprep.subr.bf16.mxu0 %v910
        %1050 = vmatpush1.bf16.msra.mxu0 %v909
        %1051 = vmatprep.subr.bf16.mxu0 %v916
        %1052 = vmatpush1.bf16.msra.mxu0 %v915
        %1053 = vmatprep.subr.bf16.mxu0 %v922
        %1054 = vmatpush1.bf16.msra.mxu0 %v921
        %1055 = vmatprep.mubr.bf16.mxu0 %v540
        %1056 = vmatmul.mubr.bf16.gmra.mrb[0].mxu0 %v539
        %v1057 = vpop.f32.mrb[0].mxu0
        %v1058 = vadd.f32 0.0, %v1057
        %v1059 = vpop.f32.mrb[0].mxu0
        %v1060 = vadd.f32 0.0, %v1059
        %v1061 = vpop.f32.mrb[0].mxu0
        %v1062 = vadd.f32 0.0, %v1061
        %v1063 = vpop.f32.mrb[0].mxu0
        %v1064 = vadd.f32 0.0, %v1063
        %1065 = vdwg.mxu0
        %1066 = vmatprep.subr.bf16.mxu0 %v834
        %1067 = vmatpush1.bf16.msra.mxu0 %v833
        %1068 = vmatprep.subr.bf16.mxu0 %v840
        %1069 = vmatpush1.bf16.msra.mxu0 %v839
        %1070 = vmatprep.subr.bf16.mxu0 %v846
        %1071 = vmatpush1.bf16.msra.mxu0 %v845
        %1072 = vmatprep.subr.bf16.mxu0 %v852
        %1073 = vmatpush1.bf16.msra.mxu0 %v851
        %1074 = vmatprep.subr.bf16.mxu0 %v858
        %1075 = vmatpush1.bf16.msra.mxu0 %v857
        %1076 = vmatprep.subr.bf16.mxu0 %v864
        %1077 = vmatpush1.bf16.msra.mxu0 %v863
        %1078 = vmatprep.subr.bf16.mxu0 %v870
        %1079 = vmatpush1.bf16.msra.mxu0 %v869
        %1080 = vmatprep.subr.bf16.mxu0 %v876
        %1081 = vmatpush1.bf16.msra.mxu0 %v875
        %1082 = vmatprep.subr.bf16.mxu0 %v882
        %1083 = vmatpush1.bf16.msra.mxu0 %v881
        %1084 = vmatprep.subr.bf16.mxu0 %v888
        %1085 = vmatpush1.bf16.msra.mxu0 %v887
        %1086 = vmatprep.subr.bf16.mxu0 %v894
        %1087 = vmatpush1.bf16.msra.mxu0 %v893
        %1088 = vmatprep.subr.bf16.mxu0 %v900
        %1089 = vmatpush1.bf16.msra.mxu0 %v899
        %1090 = vmatprep.subr.bf16.mxu0 %v906
        %1091 = vmatpush1.bf16.msra.mxu0 %v905
        %1092 = vmatprep.subr.bf16.mxu0 %v912
        %1093 = vmatpush1.bf16.msra.mxu0 %v911
        %1094 = vmatprep.subr.bf16.mxu0 %v918
        %1095 = vmatpush1.bf16.msra.mxu0 %v917
        %1096 = vmatprep.subr.bf16.mxu0 %v924
        %1097 = vmatpush1.bf16.msra.mxu0 %v923
        %1098 = vmatprep.mubr.bf16.mxu0 %v540
        %1099 = vmatmul.mubr.bf16.gmra.mrb[0].mxu0 %v539
        %v1100 = vpop.f32.mrb[0].mxu0
        %v1101 = vadd.f32 0.0, %v1100
        %v1102 = vpop.f32.mrb[0].mxu0
        %v1103 = vadd.f32 0.0, %v1102
        %v1104 = vpop.f32.mrb[0].mxu0
        %v1105 = vadd.f32 0.0, %v1104
        %v1106 = vpop.f32.mrb[0].mxu0
        %v1107 = vadd.f32 0.0, %v1106
        %1108 = vdwg.mxu0
        %1109 = vmatprep.subr.bf16.mxu0 %v836
        %1110 = vmatpush1.bf16.msra.mxu0 %v835
        %1111 = vmatprep.subr.bf16.mxu0 %v842
        %1112 = vmatpush1.bf16.msra.mxu0 %v841
        %1113 = vmatprep.subr.bf16.mxu0 %v848
        %1114 = vmatpush1.bf16.msra.mxu0 %v847
        %1115 = vmatprep.subr.bf16.mxu0 %v854
        %1116 = vmatpush1.bf16.msra.mxu0 %v853
        %1117 = vmatprep.subr.bf16.mxu0 %v860
        %1118 = vmatpush1.bf16.msra.mxu0 %v859
        %1119 = vmatprep.subr.bf16.mxu0 %v866
        %1120 = vmatpush1.bf16.msra.mxu0 %v865
        %1121 = vmatprep.subr.bf16.mxu0 %v872
        %1122 = vmatpush1.bf16.msra.mxu0 %v871
        %1123 = vmatprep.subr.bf16.mxu0 %v878
        %1124 = vmatpush1.bf16.msra.mxu0 %v877
        %1125 = vmatprep.subr.bf16.mxu0 %v884
        %1126 = vmatpush1.bf16.msra.mxu0 %v883
        %1127 = vmatprep.subr.bf16.mxu0 %v890
        %1128 = vmatpush1.bf16.msra.mxu0 %v889
        %1129 = vmatprep.subr.bf16.mxu0 %v896
        %1130 = vmatpush1.bf16.msra.mxu0 %v895
        %1131 = vmatprep.subr.bf16.mxu0 %v902
        %1132 = vmatpush1.bf16.msra.mxu0 %v901
        %1133 = vmatprep.subr.bf16.mxu0 %v908
        %1134 = vmatpush1.bf16.msra.mxu0 %v907
        %1135 = vmatprep.subr.bf16.mxu0 %v914
        %1136 = vmatpush1.bf16.msra.mxu0 %v913
        %1137 = vmatprep.subr.bf16.mxu0 %v920
        %1138 = vmatpush1.bf16.msra.mxu0 %v919
        %1139 = vmatprep.subr.bf16.mxu0 %v926
        %1140 = vmatpush1.bf16.msra.mxu0 %v925
        %1141 = vmatprep.mubr.bf16.mxu0 %v540
        %1142 = vmatmul.mubr.bf16.gmra.mrb[0].mxu0 %v539
        %v1143 = vpop.f32.mrb[0].mxu0
        %v1144 = vadd.f32 0.0, %v1143
        %v1145 = vpop.f32.mrb[0].mxu0
        %v1146 = vadd.f32 0.0, %v1145
        %v1147 = vpop.f32.mrb[0].mxu0
        %v1148 = vadd.f32 0.0, %v1147
        %v1149 = vpop.f32.mrb[0].mxu0
        %v1150 = vadd.f32 0.0, %v1149
        %1151 = vdwg.mxu0
        %v1152 = vadd.f32 %v423, %v1058
        %v1153 = vadd.f32 %v424, %v1060
        %v1154 = vadd.f32 %v425, %v1101
        %v1155 = vadd.f32 %v426, %v1103
        %v1156 = vadd.f32 %v427, %v1144
        %v1157 = vadd.f32 %v428, %v1146
        %v1158 = vadd.f32 %v429, %v1062
        %v1159 = vadd.f32 %v430, %v1064
        %v1160 = vadd.f32 %v431, %v1105
        %v1161 = vadd.f32 %v432, %v1107
        %v1162 = vadd.f32 %v433, %v1148
        %v1163 = vadd.f32 %v434, %v1150
        %1164 = vst [vmem:[#allocation2] sm:$0xff] %v1152
        %1165 = vst [vmem:[#allocation2 + $0x8] sm:$0xff] %v1153
        %1166 = vst [vmem:[#allocation2 + $0x10] sm:$0xff] %v1154
        %1167 = vst [vmem:[#allocation2 + $0x18] sm:$0xff] %v1155
        %1168 = vst [vmem:[#allocation2 + $0x20] sm:$0xff] %v1156
        %1169 = vst [vmem:[#allocation2 + $0x28] sm:$0xff] %v1157
        %1170 = vst [vmem:[#allocation2 + $0x30] sm:$0xff] %v1158
        %1171 = vst [vmem:[#allocation2 + $0x38] sm:$0xff] %v1159
        %1172 = vst [vmem:[#allocation2 + $0x40] sm:$0xff] %v1160
        %1173 = vst [vmem:[#allocation2 + $0x48] sm:$0xff] %v1161
        %1174 = vst [vmem:[#allocation2 + $0x50] sm:$0xff] %v1162
        %1175 = vst [vmem:[#allocation2 + $0x58] sm:$0xff] %v1163
        %p1176 = scmp.eq.s32.totalorder %s34, 2
        // Predicated region
        $region69: #{tpu_custom_call.1} parent=43 // pred_check
          %p1177 = pneg %p1176
        $region70: #{tpu_custom_call.1} parent=43 // pred_check_branch
          %1179 = sbr.rel (%p1177) target = $region72
        $region71: #{tpu_custom_call.1} parent=43 // pred_region
          %v1180 = vld [vmem:[#allocation2] sm:$0xff]
          %v1181 = vld [vmem:[#allocation2 + $0x8] sm:$0xff]
          %v1182 = vld [vmem:[#allocation2 + $0x10] sm:$0xff]
          %v1183 = vld [vmem:[#allocation2 + $0x18] sm:$0xff]
          %v1184 = vld [vmem:[#allocation2 + $0x20] sm:$0xff]
          %v1185 = vld [vmem:[#allocation2 + $0x28] sm:$0xff]
          %v1186 = vld [vmem:[#allocation2 + $0x30] sm:$0xff]
          %v1187 = vld [vmem:[#allocation2 + $0x38] sm:$0xff]
          %v1188 = vld [vmem:[#allocation2 + $0x40] sm:$0xff]
          %v1189 = vld [vmem:[#allocation2 + $0x48] sm:$0xff]
          %v1190 = vld [vmem:[#allocation2 + $0x50] sm:$0xff]
          %v1191 = vld [vmem:[#allocation2 + $0x58] sm:$0xff]
          %v1192 = vld [vmem:[#allocation9] sm:$0x3f]
          %v1194 = vlaneseq
          %v1195 = vshrl.u32 %v1194, 7
          %v1196 = vsub.s32 0, %v1195
          %v1197 = vrot.slane %v1192, %v1196
          %v1198 = vlaneseq
          %v1199 = vshrl.u32 %v1198, 7
          %v1200 = vsub.s32 1, %v1199
          %v1201 = vrot.slane %v1192, %v1200
          %v1202 = vlaneseq
          %v1203 = vshrl.u32 %v1202, 7
          %v1204 = vsub.s32 2, %v1203
          %v1205 = vrot.slane %v1192, %v1204
          %v1206 = vlaneseq
          %v1207 = vshrl.u32 %v1206, 7
          %v1208 = vsub.s32 3, %v1207
          %v1209 = vrot.slane %v1192, %v1208
          %v1210 = vlaneseq
          %v1211 = vshrl.u32 %v1210, 7
          %v1212 = vsub.s32 4, %v1211
          %v1213 = vrot.slane %v1192, %v1212
          %v1214 = vlaneseq
          %v1215 = vshrl.u32 %v1214, 7
          %v1216 = vsub.s32 5, %v1215
          %v1217 = vrot.slane %v1192, %v1216
          %v1224 = vadd.f32 %v1180, %v1197
          %v1225 = vadd.f32 %v1181, %v1201
          %v1226 = vadd.f32 %v1182, %v1205
          %v1227 = vadd.f32 %v1183, %v1209
          %v1228 = vadd.f32 %v1184, %v1213
          %v1229 = vadd.f32 %v1185, %v1217
          %v1230 = vadd.f32 %v1186, %v1197
          %v1231 = vadd.f32 %v1187, %v1201
          %v1232 = vadd.f32 %v1188, %v1205
          %v1233 = vadd.f32 %v1189, %v1209
          %v1234 = vadd.f32 %v1190, %v1213
          %v1235 = vadd.f32 %v1191, %v1217
          %v1236 = vtanh.pop %v1224
          %v1237 = vtanh.pop %v1225
          %v1238 = vtanh.pop %v1226
          %v1239 = vtanh.pop %v1227
          %v1240 = vtanh.pop %v1228
          %v1241 = vtanh.pop %v1229
          %v1242 = vtanh.pop %v1230
          %v1243 = vtanh.pop %v1231
          %v1244 = vtanh.pop %v1232
          %v1245 = vtanh.pop %v1233
          %v1246 = vtanh.pop %v1234
          %v1247 = vtanh.pop %v1235
          %v1248 = vld [vmem:[#allocation10] sm:$0x3f]
          %v1250 = vlaneseq
          %v1251 = vshrl.u32 %v1250, 7
          %v1252 = vsub.s32 0, %v1251
          %v1253 = vrot.slane %v1248, %v1252
          %v1254 = vlaneseq
          %v1255 = vshrl.u32 %v1254, 7
          %v1256 = vsub.s32 1, %v1255
          %v1257 = vrot.slane %v1248, %v1256
          %v1258 = vlaneseq
          %v1259 = vshrl.u32 %v1258, 7
          %v1260 = vsub.s32 2, %v1259
          %v1261 = vrot.slane %v1248, %v1260
          %v1262 = vlaneseq
          %v1263 = vshrl.u32 %v1262, 7
          %v1264 = vsub.s32 3, %v1263
          %v1265 = vrot.slane %v1248, %v1264
          %v1266 = vlaneseq
          %v1267 = vshrl.u32 %v1266, 7
          %v1268 = vsub.s32 4, %v1267
          %v1269 = vrot.slane %v1248, %v1268
          %v1270 = vlaneseq
          %v1271 = vshrl.u32 %v1270, 7
          %v1272 = vsub.s32 5, %v1271
          %v1273 = vrot.slane %v1248, %v1272
          %v1280 = vmul.f32 %v1236, %v1253
          %v1281 = vmul.f32 %v1237, %v1257
          %v1282 = vmul.f32 %v1238, %v1261
          %v1283 = vmul.f32 %v1239, %v1265
          %v1284 = vmul.f32 %v1240, %v1269
          %v1285 = vmul.f32 %v1241, %v1273
          %v1286 = vmul.f32 %v1242, %v1253
          %v1287 = vmul.f32 %v1243, %v1257
          %v1288 = vmul.f32 %v1244, %v1261
          %v1289 = vmul.f32 %v1245, %v1265
          %v1290 = vmul.f32 %v1246, %v1269
          %v1291 = vmul.f32 %v1247, %v1273
          %v1292 = vadd.f32 %v1280, %v1281
          %v1293 = vadd.f32 %v1292, %v1282
          %v1294 = vadd.f32 %v1293, %v1283
          %v1295 = vadd.f32 %v1294, %v1284
          %v1296 = vadd.f32 %v1295, %v1285
          %1297 = vadd.xlane.f32.xlu0 %v1296
          %v1298 = vpop.xlane.xlu0 %1297
          %v1299 = vadd.f32 %v1286, %v1287
          %v1300 = vadd.f32 %v1299, %v1288
          %v1301 = vadd.f32 %v1300, %v1289
          %v1302 = vadd.f32 %v1301, %v1290
          %v1303 = vadd.f32 %v1302, %v1291
          %1304 = vadd.xlane.f32.xlu0 %v1303
          %v1305 = vpop.xlane.xlu0 %1304
          %v1306 = vld [vmem:[#allocation3] sm:$0x1]
          %v1308 = vlaneseq
          %v1309 = vshrl.u32 %v1308, 7
          %v1310 = vsub.s32 0, %v1309
          %v1311 = vrot.slane %v1306, %v1310
          %v1313 = vadd.f32 %v1298, %v1311
          %v1314 = vadd.f32 %v1305, %v1311
          %vm1315 = vcmask 7168
          %1316 = vst.msk [vmem:[%s405] sm:$0xff] %vm1315, %v1313
          %1317 = vst.msk [vmem:[%s405 + $0x8] sm:$0xff] %vm1315, %v1314
          %v1318 = vpack.c.bf16 %v1242, %v1236
          %v1319 = vpack.c.bf16 %v1243, %v1237
          %v1320 = vpack.c.bf16 %v1244, %v1238
          %v1321 = vpack.c.bf16 %v1245, %v1239
          %v1322 = vpack.c.bf16 %v1246, %v1240
          %v1323 = vpack.c.bf16 %v1247, %v1241
          %v1324 = vld [vmem:[#allocation12] sm:$0xff]
          %v1325 = vld [vmem:[#allocation12 + $0x8] sm:$0xff]
          %v1326 = vld [vmem:[#allocation12 + $0x10] sm:$0xff]
          %v1327 = vld [vmem:[#allocation12 + $0x18] sm:$0xff]
          %v1328 = vld [vmem:[#allocation12 + $0x20] sm:$0xff]
          %v1329 = vld [vmem:[#allocation12 + $0x28] sm:$0xff]
          %v1330 = vld [vmem:[#allocation12 + $0x30] sm:$0xff]
          %v1331 = vld [vmem:[#allocation12 + $0x38] sm:$0xff]
          %v1332 = vld [vmem:[#allocation12 + $0x40] sm:$0xff]
          %v1333 = vld [vmem:[#allocation12 + $0x48] sm:$0xff]
          %v1334 = vld [vmem:[#allocation12 + $0x50] sm:$0xff]
          %v1335 = vld [vmem:[#allocation12 + $0x58] sm:$0xff]
          %v1336 = vld [vmem:[#allocation12 + $0x60] sm:$0xff]
          %v1337 = vld [vmem:[#allocation12 + $0x68] sm:$0xff]
          %v1338 = vld [vmem:[#allocation12 + $0x70] sm:$0xff]
          %v1339 = vld [vmem:[#allocation12 + $0x78] sm:$0xff]
          %v1340 = vld [vmem:[#allocation12 + $0x80] sm:$0xff]
          %v1341 = vld [vmem:[#allocation12 + $0x88] sm:$0xff]
          %v1342 = vld [vmem:[#allocation12 + $0x90] sm:$0xff]
          %v1343 = vld [vmem:[#allocation12 + $0x98] sm:$0xff]
          %v1344 = vld [vmem:[#allocation12 + $0xa0] sm:$0xff]
          %v1345 = vld [vmem:[#allocation12 + $0xa8] sm:$0xff]
          %v1346 = vld [vmem:[#allocation12 + $0xb0] sm:$0xff]
          %v1347 = vld [vmem:[#allocation12 + $0xb8] sm:$0xff]
          %v1348 = vld [vmem:[#allocation12 + $0xc0] sm:$0xff]
          %v1349 = vld [vmem:[#allocation12 + $0xc8] sm:$0xff]
          %v1350 = vld [vmem:[#allocation12 + $0xd0] sm:$0xff]
          %v1351 = vld [vmem:[#allocation12 + $0xd8] sm:$0xff]
          %v1352 = vld [vmem:[#allocation12 + $0xe0] sm:$0xff]
          %v1353 = vld [vmem:[#allocation12 + $0xe8] sm:$0xff]
          %v1354 = vld [vmem:[#allocation12 + $0xf0] sm:$0xff]
          %v1355 = vld [vmem:[#allocation12 + $0xf8] sm:$0xff]
          %v1356 = vld [vmem:[#allocation12 + $0x100] sm:$0xff]
          %v1357 = vld [vmem:[#allocation12 + $0x108] sm:$0xff]
          %v1358 = vld [vmem:[#allocation12 + $0x110] sm:$0xff]
          %v1359 = vld [vmem:[#allocation12 + $0x118] sm:$0xff]
          %v1360 = vld [vmem:[#allocation12 + $0x120] sm:$0xff]
          %v1361 = vld [vmem:[#allocation12 + $0x128] sm:$0xff]
          %v1362 = vld [vmem:[#allocation12 + $0x130] sm:$0xff]
          %v1363 = vld [vmem:[#allocation12 + $0x138] sm:$0xff]
          %v1364 = vld [vmem:[#allocation12 + $0x140] sm:$0xff]
          %v1365 = vld [vmem:[#allocation12 + $0x148] sm:$0xff]
          %v1366 = vld [vmem:[#allocation12 + $0x150] sm:$0xff]
          %v1367 = vld [vmem:[#allocation12 + $0x158] sm:$0xff]
          %v1368 = vld [vmem:[#allocation12 + $0x160] sm:$0xff]
          %v1369 = vld [vmem:[#allocation12 + $0x168] sm:$0xff]
          %v1370 = vld [vmem:[#allocation12 + $0x170] sm:$0xff]
          %v1371 = vld [vmem:[#allocation12 + $0x178] sm:$0xff]
          %v1372 = vld [vmem:[#allocation12 + $0x180] sm:$0xff]
          %v1373 = vld [vmem:[#allocation12 + $0x188] sm:$0xff]
          %v1374 = vld [vmem:[#allocation12 + $0x190] sm:$0xff]
          %v1375 = vld [vmem:[#allocation12 + $0x198] sm:$0xff]
          %v1376 = vld [vmem:[#allocation12 + $0x1a0] sm:$0xff]
          %v1377 = vld [vmem:[#allocation12 + $0x1a8] sm:$0xff]
          %v1378 = vld [vmem:[#allocation12 + $0x1b0] sm:$0xff]
          %v1379 = vld [vmem:[#allocation12 + $0x1b8] sm:$0xff]
          %v1380 = vld [vmem:[#allocation12 + $0x1c0] sm:$0xff]
          %v1381 = vld [vmem:[#allocation12 + $0x1c8] sm:$0xff]
          %v1382 = vld [vmem:[#allocation12 + $0x1d0] sm:$0xff]
          %v1383 = vld [vmem:[#allocation12 + $0x1d8] sm:$0xff]
          %v1384 = vld [vmem:[#allocation12 + $0x1e0] sm:$0xff]
          %v1385 = vld [vmem:[#allocation12 + $0x1e8] sm:$0xff]
          %v1386 = vld [vmem:[#allocation12 + $0x1f0] sm:$0xff]
          %v1387 = vld [vmem:[#allocation12 + $0x1f8] sm:$0xff]
          %v1388 = vld [vmem:[#allocation12 + $0x200] sm:$0xff]
          %v1389 = vld [vmem:[#allocation12 + $0x208] sm:$0xff]
          %v1390 = vld [vmem:[#allocation12 + $0x210] sm:$0xff]
          %v1391 = vld [vmem:[#allocation12 + $0x218] sm:$0xff]
          %v1392 = vld [vmem:[#allocation12 + $0x220] sm:$0xff]
          %v1393 = vld [vmem:[#allocation12 + $0x228] sm:$0xff]
          %v1394 = vld [vmem:[#allocation12 + $0x230] sm:$0xff]
          %v1395 = vld [vmem:[#allocation12 + $0x238] sm:$0xff]
          %v1396 = vld [vmem:[#allocation12 + $0x240] sm:$0xff]
          %v1397 = vld [vmem:[#allocation12 + $0x248] sm:$0xff]
          %v1398 = vld [vmem:[#allocation12 + $0x250] sm:$0xff]
          %v1399 = vld [vmem:[#allocation12 + $0x258] sm:$0xff]
          %v1400 = vld [vmem:[#allocation12 + $0x260] sm:$0xff]
          %v1401 = vld [vmem:[#allocation12 + $0x268] sm:$0xff]
          %v1402 = vld [vmem:[#allocation12 + $0x270] sm:$0xff]
          %v1403 = vld [vmem:[#allocation12 + $0x278] sm:$0xff]
          %v1404 = vld [vmem:[#allocation12 + $0x280] sm:$0xff]
          %v1405 = vld [vmem:[#allocation12 + $0x288] sm:$0xff]
          %v1406 = vld [vmem:[#allocation12 + $0x290] sm:$0xff]
          %v1407 = vld [vmem:[#allocation12 + $0x298] sm:$0xff]
          %v1408 = vld [vmem:[#allocation12 + $0x2a0] sm:$0xff]
          %v1409 = vld [vmem:[#allocation12 + $0x2a8] sm:$0xff]
          %v1410 = vld [vmem:[#allocation12 + $0x2b0] sm:$0xff]
          %v1411 = vld [vmem:[#allocation12 + $0x2b8] sm:$0xff]
          %v1412 = vld [vmem:[#allocation12 + $0x2c0] sm:$0xff]
          %v1413 = vld [vmem:[#allocation12 + $0x2c8] sm:$0xff]
          %v1414 = vld [vmem:[#allocation12 + $0x2d0] sm:$0xff]
          %v1415 = vld [vmem:[#allocation12 + $0x2d8] sm:$0xff]
          %v1416 = vld [vmem:[#allocation12 + $0x2e0] sm:$0xff]
          %v1417 = vld [vmem:[#allocation12 + $0x2e8] sm:$0xff]
          %v1418 = vld [vmem:[#allocation12 + $0x2f0] sm:$0xff]
          %v1419 = vld [vmem:[#allocation12 + $0x2f8] sm:$0xff]
          %v1420 = vld [vmem:[#allocation12 + $0x300] sm:$0xff]
          %v1421 = vld [vmem:[#allocation12 + $0x308] sm:$0xff]
          %v1422 = vld [vmem:[#allocation12 + $0x310] sm:$0xff]
          %v1423 = vld [vmem:[#allocation12 + $0x318] sm:$0xff]
          %v1424 = vld [vmem:[#allocation12 + $0x320] sm:$0xff]
          %v1425 = vld [vmem:[#allocation12 + $0x328] sm:$0xff]
          %v1426 = vld [vmem:[#allocation12 + $0x330] sm:$0xff]
          %v1427 = vld [vmem:[#allocation12 + $0x338] sm:$0xff]
          %v1428 = vld [vmem:[#allocation12 + $0x340] sm:$0xff]
          %v1429 = vld [vmem:[#allocation12 + $0x348] sm:$0xff]
          %v1430 = vld [vmem:[#allocation12 + $0x350] sm:$0xff]
          %v1431 = vld [vmem:[#allocation12 + $0x358] sm:$0xff]
          %v1432 = vld [vmem:[#allocation12 + $0x360] sm:$0xff]
          %v1433 = vld [vmem:[#allocation12 + $0x368] sm:$0xff]
          %v1434 = vld [vmem:[#allocation12 + $0x370] sm:$0xff]
          %v1435 = vld [vmem:[#allocation12 + $0x378] sm:$0xff]
          %v1436 = vld [vmem:[#allocation12 + $0x380] sm:$0xff]
          %v1437 = vld [vmem:[#allocation12 + $0x388] sm:$0xff]
          %v1438 = vld [vmem:[#allocation12 + $0x390] sm:$0xff]
          %v1439 = vld [vmem:[#allocation12 + $0x398] sm:$0xff]
          %v1440 = vld [vmem:[#allocation12 + $0x3a0] sm:$0xff]
          %v1441 = vld [vmem:[#allocation12 + $0x3a8] sm:$0xff]
          %v1442 = vld [vmem:[#allocation12 + $0x3b0] sm:$0xff]
          %v1443 = vld [vmem:[#allocation12 + $0x3b8] sm:$0xff]
          %v1444 = vld [vmem:[#allocation12 + $0x3c0] sm:$0xff]
          %v1445 = vld [vmem:[#allocation12 + $0x3c8] sm:$0xff]
          %v1446 = vld [vmem:[#allocation12 + $0x3d0] sm:$0xff]
          %v1447 = vld [vmem:[#allocation12 + $0x3d8] sm:$0xff]
          %v1448 = vld [vmem:[#allocation12 + $0x3e0] sm:$0xff]
          %v1449 = vld [vmem:[#allocation12 + $0x3e8] sm:$0xff]
          %v1450 = vld [vmem:[#allocation12 + $0x3f0] sm:$0xff]
          %v1451 = vld [vmem:[#allocation12 + $0x3f8] sm:$0xff]
          %v1452 = vld [vmem:[#allocation12 + $0x400] sm:$0xff]
          %v1453 = vld [vmem:[#allocation12 + $0x408] sm:$0xff]
          %v1454 = vld [vmem:[#allocation12 + $0x410] sm:$0xff]
          %v1455 = vld [vmem:[#allocation12 + $0x418] sm:$0xff]
          %v1456 = vld [vmem:[#allocation12 + $0x420] sm:$0xff]
          %v1457 = vld [vmem:[#allocation12 + $0x428] sm:$0xff]
          %v1458 = vld [vmem:[#allocation12 + $0x430] sm:$0xff]
          %v1459 = vld [vmem:[#allocation12 + $0x438] sm:$0xff]
          %v1460 = vld [vmem:[#allocation12 + $0x440] sm:$0xff]
          %v1461 = vld [vmem:[#allocation12 + $0x448] sm:$0xff]
          %v1462 = vld [vmem:[#allocation12 + $0x450] sm:$0xff]
          %v1463 = vld [vmem:[#allocation12 + $0x458] sm:$0xff]
          %v1464 = vld [vmem:[#allocation12 + $0x460] sm:$0xff]
          %v1465 = vld [vmem:[#allocation12 + $0x468] sm:$0xff]
          %v1466 = vld [vmem:[#allocation12 + $0x470] sm:$0xff]
          %v1467 = vld [vmem:[#allocation12 + $0x478] sm:$0xff]
          %v1468 = vld [vmem:[#allocation12 + $0x480] sm:$0xff]
          %v1469 = vld [vmem:[#allocation12 + $0x488] sm:$0xff]
          %v1470 = vld [vmem:[#allocation12 + $0x490] sm:$0xff]
          %v1471 = vld [vmem:[#allocation12 + $0x498] sm:$0xff]
          %v1472 = vld [vmem:[#allocation12 + $0x4a0] sm:$0xff]
          %v1473 = vld [vmem:[#allocation12 + $0x4a8] sm:$0xff]
          %v1474 = vld [vmem:[#allocation12 + $0x4b0] sm:$0xff]
          %v1475 = vld [vmem:[#allocation12 + $0x4b8] sm:$0xff]
          %v1476 = vld [vmem:[#allocation12 + $0x4c0] sm:$0xff]
          %v1477 = vld [vmem:[#allocation12 + $0x4c8] sm:$0xff]
          %v1478 = vld [vmem:[#allocation12 + $0x4d0] sm:$0xff]
          %v1479 = vld [vmem:[#allocation12 + $0x4d8] sm:$0xff]
          %v1480 = vld [vmem:[#allocation12 + $0x4e0] sm:$0xff]
          %v1481 = vld [vmem:[#allocation12 + $0x4e8] sm:$0xff]
          %v1482 = vld [vmem:[#allocation12 + $0x4f0] sm:$0xff]
          %v1483 = vld [vmem:[#allocation12 + $0x4f8] sm:$0xff]
          %v1484 = vld [vmem:[#allocation12 + $0x500] sm:$0xff]
          %v1485 = vld [vmem:[#allocation12 + $0x508] sm:$0xff]
          %v1486 = vld [vmem:[#allocation12 + $0x510] sm:$0xff]
          %v1487 = vld [vmem:[#allocation12 + $0x518] sm:$0xff]
          %v1488 = vld [vmem:[#allocation12 + $0x520] sm:$0xff]
          %v1489 = vld [vmem:[#allocation12 + $0x528] sm:$0xff]
          %v1490 = vld [vmem:[#allocation12 + $0x530] sm:$0xff]
          %v1491 = vld [vmem:[#allocation12 + $0x538] sm:$0xff]
          %v1492 = vld [vmem:[#allocation12 + $0x540] sm:$0xff]
          %v1493 = vld [vmem:[#allocation12 + $0x548] sm:$0xff]
          %v1494 = vld [vmem:[#allocation12 + $0x550] sm:$0xff]
          %v1495 = vld [vmem:[#allocation12 + $0x558] sm:$0xff]
          %v1496 = vld [vmem:[#allocation12 + $0x560] sm:$0xff]
          %v1497 = vld [vmem:[#allocation12 + $0x568] sm:$0xff]
          %v1498 = vld [vmem:[#allocation12 + $0x570] sm:$0xff]
          %v1499 = vld [vmem:[#allocation12 + $0x578] sm:$0xff]
          %v1500 = vld [vmem:[#allocation12 + $0x580] sm:$0xff]
          %v1501 = vld [vmem:[#allocation12 + $0x588] sm:$0xff]
          %v1502 = vld [vmem:[#allocation12 + $0x590] sm:$0xff]
          %v1503 = vld [vmem:[#allocation12 + $0x598] sm:$0xff]
          %v1504 = vld [vmem:[#allocation12 + $0x5a0] sm:$0xff]
          %v1505 = vld [vmem:[#allocation12 + $0x5a8] sm:$0xff]
          %v1506 = vld [vmem:[#allocation12 + $0x5b0] sm:$0xff]
          %v1507 = vld [vmem:[#allocation12 + $0x5b8] sm:$0xff]
          %v1508 = vld [vmem:[#allocation12 + $0x5c0] sm:$0xff]
          %v1509 = vld [vmem:[#allocation12 + $0x5c8] sm:$0xff]
          %v1510 = vld [vmem:[#allocation12 + $0x5d0] sm:$0xff]
          %v1511 = vld [vmem:[#allocation12 + $0x5d8] sm:$0xff]
          %v1512 = vld [vmem:[#allocation12 + $0x5e0] sm:$0xff]
          %v1513 = vld [vmem:[#allocation12 + $0x5e8] sm:$0xff]
          %v1514 = vld [vmem:[#allocation12 + $0x5f0] sm:$0xff]
          %v1515 = vld [vmem:[#allocation12 + $0x5f8] sm:$0xff]
          %v1708 = vunpack.c.l.b16 %v1324
          %v1709 = vunpack.c.h.b16 %v1324
          %v1710 = vunpack.c.l.b16 %v1325
          %v1711 = vunpack.c.h.b16 %v1325
          %v1712 = vunpack.c.l.b16 %v1326
          %v1713 = vunpack.c.h.b16 %v1326
          %v1714 = vunpack.c.l.b16 %v1327
          %v1715 = vunpack.c.h.b16 %v1327
          %v1716 = vunpack.c.l.b16 %v1328
          %v1717 = vunpack.c.h.b16 %v1328
          %v1718 = vunpack.c.l.b16 %v1329
          %v1719 = vunpack.c.h.b16 %v1329
          %v1720 = vunpack.c.l.b16 %v1330
          %v1721 = vunpack.c.h.b16 %v1330
          %v1722 = vunpack.c.l.b16 %v1331
          %v1723 = vunpack.c.h.b16 %v1331
          %v1724 = vunpack.c.l.b16 %v1332
          %v1725 = vunpack.c.h.b16 %v1332
          %v1726 = vunpack.c.l.b16 %v1333
          %v1727 = vunpack.c.h.b16 %v1333
          %v1728 = vunpack.c.l.b16 %v1334
          %v1729 = vunpack.c.h.b16 %v1334
          %v1730 = vunpack.c.l.b16 %v1335
          %v1731 = vunpack.c.h.b16 %v1335
          %v1732 = vunpack.c.l.b16 %v1336
          %v1733 = vunpack.c.h.b16 %v1336
          %v1734 = vunpack.c.l.b16 %v1337
          %v1735 = vunpack.c.h.b16 %v1337
          %v1736 = vunpack.c.l.b16 %v1338
          %v1737 = vunpack.c.h.b16 %v1338
          %v1738 = vunpack.c.l.b16 %v1339
          %v1739 = vunpack.c.h.b16 %v1339
          %v1740 = vunpack.c.l.b16 %v1340
          %v1741 = vunpack.c.h.b16 %v1340
          %v1742 = vunpack.c.l.b16 %v1341
          %v1743 = vunpack.c.h.b16 %v1341
          %v1744 = vunpack.c.l.b16 %v1342
          %v1745 = vunpack.c.h.b16 %v1342
          %v1746 = vunpack.c.l.b16 %v1343
          %v1747 = vunpack.c.h.b16 %v1343
          %v1748 = vunpack.c.l.b16 %v1344
          %v1749 = vunpack.c.h.b16 %v1344
          %v1750 = vunpack.c.l.b16 %v1345
          %v1751 = vunpack.c.h.b16 %v1345
          %v1752 = vunpack.c.l.b16 %v1346
          %v1753 = vunpack.c.h.b16 %v1346
          %v1754 = vunpack.c.l.b16 %v1347
          %v1755 = vunpack.c.h.b16 %v1347
          %v1756 = vunpack.c.l.b16 %v1348
          %v1757 = vunpack.c.h.b16 %v1348
          %v1758 = vunpack.c.l.b16 %v1349
          %v1759 = vunpack.c.h.b16 %v1349
          %v1760 = vunpack.c.l.b16 %v1350
          %v1761 = vunpack.c.h.b16 %v1350
          %v1762 = vunpack.c.l.b16 %v1351
          %v1763 = vunpack.c.h.b16 %v1351
          %v1764 = vunpack.c.l.b16 %v1352
          %v1765 = vunpack.c.h.b16 %v1352
          %v1766 = vunpack.c.l.b16 %v1353
          %v1767 = vunpack.c.h.b16 %v1353
          %v1768 = vunpack.c.l.b16 %v1354
          %v1769 = vunpack.c.h.b16 %v1354
          %v1770 = vunpack.c.l.b16 %v1355
          %v1771 = vunpack.c.h.b16 %v1355
          %v1772 = vunpack.c.l.b16 %v1356
          %v1773 = vunpack.c.h.b16 %v1356
          %v1774 = vunpack.c.l.b16 %v1357
          %v1775 = vunpack.c.h.b16 %v1357
          %v1776 = vunpack.c.l.b16 %v1358
          %v1777 = vunpack.c.h.b16 %v1358
          %v1778 = vunpack.c.l.b16 %v1359
          %v1779 = vunpack.c.h.b16 %v1359
          %v1780 = vunpack.c.l.b16 %v1360
          %v1781 = vunpack.c.h.b16 %v1360
          %v1782 = vunpack.c.l.b16 %v1361
          %v1783 = vunpack.c.h.b16 %v1361
          %v1784 = vunpack.c.l.b16 %v1362
          %v1785 = vunpack.c.h.b16 %v1362
          %v1786 = vunpack.c.l.b16 %v1363
          %v1787 = vunpack.c.h.b16 %v1363
          %v1788 = vunpack.c.l.b16 %v1364
          %v1789 = vunpack.c.h.b16 %v1364
          %v1790 = vunpack.c.l.b16 %v1365
          %v1791 = vunpack.c.h.b16 %v1365
          %v1792 = vunpack.c.l.b16 %v1366
          %v1793 = vunpack.c.h.b16 %v1366
          %v1794 = vunpack.c.l.b16 %v1367
          %v1795 = vunpack.c.h.b16 %v1367
          %v1796 = vunpack.c.l.b16 %v1368
          %v1797 = vunpack.c.h.b16 %v1368
          %v1798 = vunpack.c.l.b16 %v1369
          %v1799 = vunpack.c.h.b16 %v1369
          %v1800 = vunpack.c.l.b16 %v1370
          %v1801 = vunpack.c.h.b16 %v1370
          %v1802 = vunpack.c.l.b16 %v1371
          %v1803 = vunpack.c.h.b16 %v1371
          %v1804 = vunpack.c.l.b16 %v1372
          %v1805 = vunpack.c.h.b16 %v1372
          %v1806 = vunpack.c.l.b16 %v1373
          %v1807 = vunpack.c.h.b16 %v1373
          %v1808 = vunpack.c.l.b16 %v1374
          %v1809 = vunpack.c.h.b16 %v1374
          %v1810 = vunpack.c.l.b16 %v1375
          %v1811 = vunpack.c.h.b16 %v1375
          %v1812 = vunpack.c.l.b16 %v1376
          %v1813 = vunpack.c.h.b16 %v1376
          %v1814 = vunpack.c.l.b16 %v1377
          %v1815 = vunpack.c.h.b16 %v1377
          %v1816 = vunpack.c.l.b16 %v1378
          %v1817 = vunpack.c.h.b16 %v1378
          %v1818 = vunpack.c.l.b16 %v1379
          %v1819 = vunpack.c.h.b16 %v1379
          %v1820 = vunpack.c.l.b16 %v1380
          %v1821 = vunpack.c.h.b16 %v1380
          %v1822 = vunpack.c.l.b16 %v1381
          %v1823 = vunpack.c.h.b16 %v1381
          %v1824 = vunpack.c.l.b16 %v1382
          %v1825 = vunpack.c.h.b16 %v1382
          %v1826 = vunpack.c.l.b16 %v1383
          %v1827 = vunpack.c.h.b16 %v1383
          %v1828 = vunpack.c.l.b16 %v1384
          %v1829 = vunpack.c.h.b16 %v1384
          %v1830 = vunpack.c.l.b16 %v1385
          %v1831 = vunpack.c.h.b16 %v1385
          %v1832 = vunpack.c.l.b16 %v1386
          %v1833 = vunpack.c.h.b16 %v1386
          %v1834 = vunpack.c.l.b16 %v1387
          %v1835 = vunpack.c.h.b16 %v1387
          %v1836 = vunpack.c.l.b16 %v1388
          %v1837 = vunpack.c.h.b16 %v1388
          %v1838 = vunpack.c.l.b16 %v1389
          %v1839 = vunpack.c.h.b16 %v1389
          %v1840 = vunpack.c.l.b16 %v1390
          %v1841 = vunpack.c.h.b16 %v1390
          %v1842 = vunpack.c.l.b16 %v1391
          %v1843 = vunpack.c.h.b16 %v1391
          %v1844 = vunpack.c.l.b16 %v1392
          %v1845 = vunpack.c.h.b16 %v1392
          %v1846 = vunpack.c.l.b16 %v1393
          %v1847 = vunpack.c.h.b16 %v1393
          %v1848 = vunpack.c.l.b16 %v1394
          %v1849 = vunpack.c.h.b16 %v1394
          %v1850 = vunpack.c.l.b16 %v1395
          %v1851 = vunpack.c.h.b16 %v1395
          %v1852 = vunpack.c.l.b16 %v1396
          %v1853 = vunpack.c.h.b16 %v1396
          %v1854 = vunpack.c.l.b16 %v1397
          %v1855 = vunpack.c.h.b16 %v1397
          %v1856 = vunpack.c.l.b16 %v1398
          %v1857 = vunpack.c.h.b16 %v1398
          %v1858 = vunpack.c.l.b16 %v1399
          %v1859 = vunpack.c.h.b16 %v1399
          %v1860 = vunpack.c.l.b16 %v1400
          %v1861 = vunpack.c.h.b16 %v1400
          %v1862 = vunpack.c.l.b16 %v1401
          %v1863 = vunpack.c.h.b16 %v1401
          %v1864 = vunpack.c.l.b16 %v1402
          %v1865 = vunpack.c.h.b16 %v1402
          %v1866 = vunpack.c.l.b16 %v1403
          %v1867 = vunpack.c.h.b16 %v1403
          %v1868 = vunpack.c.l.b16 %v1404
          %v1869 = vunpack.c.h.b16 %v1404
          %v1870 = vunpack.c.l.b16 %v1405
          %v1871 = vunpack.c.h.b16 %v1405
          %v1872 = vunpack.c.l.b16 %v1406
          %v1873 = vunpack.c.h.b16 %v1406
          %v1874 = vunpack.c.l.b16 %v1407
          %v1875 = vunpack.c.h.b16 %v1407
          %v1876 = vunpack.c.l.b16 %v1408
          %v1877 = vunpack.c.h.b16 %v1408
          %v1878 = vunpack.c.l.b16 %v1409
          %v1879 = vunpack.c.h.b16 %v1409
          %v1880 = vunpack.c.l.b16 %v1410
          %v1881 = vunpack.c.h.b16 %v1410
          %v1882 = vunpack.c.l.b16 %v1411
          %v1883 = vunpack.c.h.b16 %v1411
          %v1884 = vunpack.c.l.b16 %v1412
          %v1885 = vunpack.c.h.b16 %v1412
          %v1886 = vunpack.c.l.b16 %v1413
          %v1887 = vunpack.c.h.b16 %v1413
          %v1888 = vunpack.c.l.b16 %v1414
          %v1889 = vunpack.c.h.b16 %v1414
          %v1890 = vunpack.c.l.b16 %v1415
          %v1891 = vunpack.c.h.b16 %v1415
          %v1892 = vunpack.c.l.b16 %v1416
          %v1893 = vunpack.c.h.b16 %v1416
          %v1894 = vunpack.c.l.b16 %v1417
          %v1895 = vunpack.c.h.b16 %v1417
          %v1896 = vunpack.c.l.b16 %v1418
          %v1897 = vunpack.c.h.b16 %v1418
          %v1898 = vunpack.c.l.b16 %v1419
          %v1899 = vunpack.c.h.b16 %v1419
          %v1900 = vunpack.c.l.b16 %v1420
          %v1901 = vunpack.c.h.b16 %v1420
          %v1902 = vunpack.c.l.b16 %v1421
          %v1903 = vunpack.c.h.b16 %v1421
          %v1904 = vunpack.c.l.b16 %v1422
          %v1905 = vunpack.c.h.b16 %v1422
          %v1906 = vunpack.c.l.b16 %v1423
          %v1907 = vunpack.c.h.b16 %v1423
          %v1908 = vunpack.c.l.b16 %v1424
          %v1909 = vunpack.c.h.b16 %v1424
          %v1910 = vunpack.c.l.b16 %v1425
          %v1911 = vunpack.c.h.b16 %v1425
          %v1912 = vunpack.c.l.b16 %v1426
          %v1913 = vunpack.c.h.b16 %v1426
          %v1914 = vunpack.c.l.b16 %v1427
          %v1915 = vunpack.c.h.b16 %v1427
          %v1916 = vunpack.c.l.b16 %v1428
          %v1917 = vunpack.c.h.b16 %v1428
          %v1918 = vunpack.c.l.b16 %v1429
          %v1919 = vunpack.c.h.b16 %v1429
          %v1920 = vunpack.c.l.b16 %v1430
          %v1921 = vunpack.c.h.b16 %v1430
          %v1922 = vunpack.c.l.b16 %v1431
          %v1923 = vunpack.c.h.b16 %v1431
          %v1924 = vunpack.c.l.b16 %v1432
          %v1925 = vunpack.c.h.b16 %v1432
          %v1926 = vunpack.c.l.b16 %v1433
          %v1927 = vunpack.c.h.b16 %v1433
          %v1928 = vunpack.c.l.b16 %v1434
          %v1929 = vunpack.c.h.b16 %v1434
          %v1930 = vunpack.c.l.b16 %v1435
          %v1931 = vunpack.c.h.b16 %v1435
          %v1932 = vunpack.c.l.b16 %v1436
          %v1933 = vunpack.c.h.b16 %v1436
          %v1934 = vunpack.c.l.b16 %v1437
          %v1935 = vunpack.c.h.b16 %v1437
          %v1936 = vunpack.c.l.b16 %v1438
          %v1937 = vunpack.c.h.b16 %v1438
          %v1938 = vunpack.c.l.b16 %v1439
          %v1939 = vunpack.c.h.b16 %v1439
          %v1940 = vunpack.c.l.b16 %v1440
          %v1941 = vunpack.c.h.b16 %v1440
          %v1942 = vunpack.c.l.b16 %v1441
          %v1943 = vunpack.c.h.b16 %v1441
          %v1944 = vunpack.c.l.b16 %v1442
          %v1945 = vunpack.c.h.b16 %v1442
          %v1946 = vunpack.c.l.b16 %v1443
          %v1947 = vunpack.c.h.b16 %v1443
          %v1948 = vunpack.c.l.b16 %v1444
          %v1949 = vunpack.c.h.b16 %v1444
          %v1950 = vunpack.c.l.b16 %v1445
          %v1951 = vunpack.c.h.b16 %v1445
          %v1952 = vunpack.c.l.b16 %v1446
          %v1953 = vunpack.c.h.b16 %v1446
          %v1954 = vunpack.c.l.b16 %v1447
          %v1955 = vunpack.c.h.b16 %v1447
          %v1956 = vunpack.c.l.b16 %v1448
          %v1957 = vunpack.c.h.b16 %v1448
          %v1958 = vunpack.c.l.b16 %v1449
          %v1959 = vunpack.c.h.b16 %v1449
          %v1960 = vunpack.c.l.b16 %v1450
          %v1961 = vunpack.c.h.b16 %v1450
          %v1962 = vunpack.c.l.b16 %v1451
          %v1963 = vunpack.c.h.b16 %v1451
          %v1964 = vunpack.c.l.b16 %v1452
          %v1965 = vunpack.c.h.b16 %v1452
          %v1966 = vunpack.c.l.b16 %v1453
          %v1967 = vunpack.c.h.b16 %v1453
          %v1968 = vunpack.c.l.b16 %v1454
          %v1969 = vunpack.c.h.b16 %v1454
          %v1970 = vunpack.c.l.b16 %v1455
          %v1971 = vunpack.c.h.b16 %v1455
          %v1972 = vunpack.c.l.b16 %v1456
          %v1973 = vunpack.c.h.b16 %v1456
          %v1974 = vunpack.c.l.b16 %v1457
          %v1975 = vunpack.c.h.b16 %v1457
          %v1976 = vunpack.c.l.b16 %v1458
          %v1977 = vunpack.c.h.b16 %v1458
          %v1978 = vunpack.c.l.b16 %v1459
          %v1979 = vunpack.c.h.b16 %v1459
          %v1980 = vunpack.c.l.b16 %v1460
          %v1981 = vunpack.c.h.b16 %v1460
          %v1982 = vunpack.c.l.b16 %v1461
          %v1983 = vunpack.c.h.b16 %v1461
          %v1984 = vunpack.c.l.b16 %v1462
          %v1985 = vunpack.c.h.b16 %v1462
          %v1986 = vunpack.c.l.b16 %v1463
          %v1987 = vunpack.c.h.b16 %v1463
          %v1988 = vunpack.c.l.b16 %v1464
          %v1989 = vunpack.c.h.b16 %v1464
          %v1990 = vunpack.c.l.b16 %v1465
          %v1991 = vunpack.c.h.b16 %v1465
          %v1992 = vunpack.c.l.b16 %v1466
          %v1993 = vunpack.c.h.b16 %v1466
          %v1994 = vunpack.c.l.b16 %v1467
          %v1995 = vunpack.c.h.b16 %v1467
          %v1996 = vunpack.c.l.b16 %v1468
          %v1997 = vunpack.c.h.b16 %v1468
          %v1998 = vunpack.c.l.b16 %v1469
          %v1999 = vunpack.c.h.b16 %v1469
          %v2000 = vunpack.c.l.b16 %v1470
          %v2001 = vunpack.c.h.b16 %v1470
          %v2002 = vunpack.c.l.b16 %v1471
          %v2003 = vunpack.c.h.b16 %v1471
          %v2004 = vunpack.c.l.b16 %v1472
          %v2005 = vunpack.c.h.b16 %v1472
          %v2006 = vunpack.c.l.b16 %v1473
          %v2007 = vunpack.c.h.b16 %v1473
          %v2008 = vunpack.c.l.b16 %v1474
          %v2009 = vunpack.c.h.b16 %v1474
          %v2010 = vunpack.c.l.b16 %v1475
          %v2011 = vunpack.c.h.b16 %v1475
          %v2012 = vunpack.c.l.b16 %v1476
          %v2013 = vunpack.c.h.b16 %v1476
          %v2014 = vunpack.c.l.b16 %v1477
          %v2015 = vunpack.c.h.b16 %v1477
          %v2016 = vunpack.c.l.b16 %v1478
          %v2017 = vunpack.c.h.b16 %v1478
          %v2018 = vunpack.c.l.b16 %v1479
          %v2019 = vunpack.c.h.b16 %v1479
          %v2020 = vunpack.c.l.b16 %v1480
          %v2021 = vunpack.c.h.b16 %v1480
          %v2022 = vunpack.c.l.b16 %v1481
          %v2023 = vunpack.c.h.b16 %v1481
          %v2024 = vunpack.c.l.b16 %v1482
          %v2025 = vunpack.c.h.b16 %v1482
          %v2026 = vunpack.c.l.b16 %v1483
          %v2027 = vunpack.c.h.b16 %v1483
          %v2028 = vunpack.c.l.b16 %v1484
          %v2029 = vunpack.c.h.b16 %v1484
          %v2030 = vunpack.c.l.b16 %v1485
          %v2031 = vunpack.c.h.b16 %v1485
          %v2032 = vunpack.c.l.b16 %v1486
          %v2033 = vunpack.c.h.b16 %v1486
          %v2034 = vunpack.c.l.b16 %v1487
          %v2035 = vunpack.c.h.b16 %v1487
          %v2036 = vunpack.c.l.b16 %v1488
          %v2037 = vunpack.c.h.b16 %v1488
          %v2038 = vunpack.c.l.b16 %v1489
          %v2039 = vunpack.c.h.b16 %v1489
          %v2040 = vunpack.c.l.b16 %v1490
          %v2041 = vunpack.c.h.b16 %v1490
          %v2042 = vunpack.c.l.b16 %v1491
          %v2043 = vunpack.c.h.b16 %v1491
          %v2044 = vunpack.c.l.b16 %v1492
          %v2045 = vunpack.c.h.b16 %v1492
          %v2046 = vunpack.c.l.b16 %v1493
          %v2047 = vunpack.c.h.b16 %v1493
          %v2048 = vunpack.c.l.b16 %v1494
          %v2049 = vunpack.c.h.b16 %v1494
          %v2050 = vunpack.c.l.b16 %v1495
          %v2051 = vunpack.c.h.b16 %v1495
          %v2052 = vunpack.c.l.b16 %v1496
          %v2053 = vunpack.c.h.b16 %v1496
          %v2054 = vunpack.c.l.b16 %v1497
          %v2055 = vunpack.c.h.b16 %v1497
          %v2056 = vunpack.c.l.b16 %v1498
          %v2057 = vunpack.c.h.b16 %v1498
          %v2058 = vunpack.c.l.b16 %v1499
          %v2059 = vunpack.c.h.b16 %v1499
          %v2060 = vunpack.c.l.b16 %v1500
          %v2061 = vunpack.c.h.b16 %v1500
          %v2062 = vunpack.c.l.b16 %v1501
          %v2063 = vunpack.c.h.b16 %v1501
          %v2064 = vunpack.c.l.b16 %v1502
          %v2065 = vunpack.c.h.b16 %v1502
          %v2066 = vunpack.c.l.b16 %v1503
          %v2067 = vunpack.c.h.b16 %v1503
          %v2068 = vunpack.c.l.b16 %v1504
          %v2069 = vunpack.c.h.b16 %v1504
          %v2070 = vunpack.c.l.b16 %v1505
          %v2071 = vunpack.c.h.b16 %v1505
          %v2072 = vunpack.c.l.b16 %v1506
          %v2073 = vunpack.c.h.b16 %v1506
          %v2074 = vunpack.c.l.b16 %v1507
          %v2075 = vunpack.c.h.b16 %v1507
          %v2076 = vunpack.c.l.b16 %v1508
          %v2077 = vunpack.c.h.b16 %v1508
          %v2078 = vunpack.c.l.b16 %v1509
          %v2079 = vunpack.c.h.b16 %v1509
          %v2080 = vunpack.c.l.b16 %v1510
          %v2081 = vunpack.c.h.b16 %v1510
          %v2082 = vunpack.c.l.b16 %v1511
          %v2083 = vunpack.c.h.b16 %v1511
          %v2084 = vunpack.c.l.b16 %v1512
          %v2085 = vunpack.c.h.b16 %v1512
          %v2086 = vunpack.c.l.b16 %v1513
          %v2087 = vunpack.c.h.b16 %v1513
          %v2088 = vunpack.c.l.b16 %v1514
          %v2089 = vunpack.c.h.b16 %v1514
          %v2090 = vunpack.c.l.b16 %v1515
          %v2091 = vunpack.c.h.b16 %v1515
          %v2092 = vpack.c.b16 %v1712, %v1708
          %v2093 = vpack.c.b16 %v1713, %v1709
          %v2094 = vpack.c.b16 %v1714, %v1710
          %v2095 = vpack.c.b16 %v1715, %v1711
          %v2096 = vpack.c.b16 %v1720, %v1716
          %v2097 = vpack.c.b16 %v1721, %v1717
          %v2098 = vpack.c.b16 %v1722, %v1718
          %v2099 = vpack.c.b16 %v1723, %v1719
          %v2100 = vpack.c.b16 %v1728, %v1724
          %v2101 = vpack.c.b16 %v1729, %v1725
          %v2102 = vpack.c.b16 %v1730, %v1726
          %v2103 = vpack.c.b16 %v1731, %v1727
          %v2104 = vpack.c.b16 %v1736, %v1732
          %v2105 = vpack.c.b16 %v1737, %v1733
          %v2106 = vpack.c.b16 %v1738, %v1734
          %v2107 = vpack.c.b16 %v1739, %v1735
          %v2108 = vpack.c.b16 %v1744, %v1740
          %v2109 = vpack.c.b16 %v1745, %v1741
          %v2110 = vpack.c.b16 %v1746, %v1742
          %v2111 = vpack.c.b16 %v1747, %v1743
          %v2112 = vpack.c.b16 %v1752, %v1748
          %v2113 = vpack.c.b16 %v1753, %v1749
          %v2114 = vpack.c.b16 %v1754, %v1750
          %v2115 = vpack.c.b16 %v1755, %v1751
          %v2116 = vpack.c.b16 %v1760, %v1756
          %v2117 = vpack.c.b16 %v1761, %v1757
          %v2118 = vpack.c.b16 %v1762, %v1758
          %v2119 = vpack.c.b16 %v1763, %v1759
          %v2120 = vpack.c.b16 %v1768, %v1764
          %v2121 = vpack.c.b16 %v1769, %v1765
          %v2122 = vpack.c.b16 %v1770, %v1766
          %v2123 = vpack.c.b16 %v1771, %v1767
          %v2124 = vpack.c.b16 %v1776, %v1772
          %v2125 = vpack.c.b16 %v1777, %v1773
          %v2126 = vpack.c.b16 %v1778, %v1774
          %v2127 = vpack.c.b16 %v1779, %v1775
          %v2128 = vpack.c.b16 %v1784, %v1780
          %v2129 = vpack.c.b16 %v1785, %v1781
          %v2130 = vpack.c.b16 %v1786, %v1782
          %v2131 = vpack.c.b16 %v1787, %v1783
          %v2132 = vpack.c.b16 %v1792, %v1788
          %v2133 = vpack.c.b16 %v1793, %v1789
          %v2134 = vpack.c.b16 %v1794, %v1790
          %v2135 = vpack.c.b16 %v1795, %v1791
          %v2136 = vpack.c.b16 %v1800, %v1796
          %v2137 = vpack.c.b16 %v1801, %v1797
          %v2138 = vpack.c.b16 %v1802, %v1798
          %v2139 = vpack.c.b16 %v1803, %v1799
          %v2140 = vpack.c.b16 %v1808, %v1804
          %v2141 = vpack.c.b16 %v1809, %v1805
          %v2142 = vpack.c.b16 %v1810, %v1806
          %v2143 = vpack.c.b16 %v1811, %v1807
          %v2144 = vpack.c.b16 %v1816, %v1812
          %v2145 = vpack.c.b16 %v1817, %v1813
          %v2146 = vpack.c.b16 %v1818, %v1814
          %v2147 = vpack.c.b16 %v1819, %v1815
          %v2148 = vpack.c.b16 %v1824, %v1820
          %v2149 = vpack.c.b16 %v1825, %v1821
          %v2150 = vpack.c.b16 %v1826, %v1822
          %v2151 = vpack.c.b16 %v1827, %v1823
          %v2152 = vpack.c.b16 %v1832, %v1828
          %v2153 = vpack.c.b16 %v1833, %v1829
          %v2154 = vpack.c.b16 %v1834, %v1830
          %v2155 = vpack.c.b16 %v1835, %v1831
          %v2156 = vpack.c.b16 %v1840, %v1836
          %v2157 = vpack.c.b16 %v1841, %v1837
          %v2158 = vpack.c.b16 %v1842, %v1838
          %v2159 = vpack.c.b16 %v1843, %v1839
          %v2160 = vpack.c.b16 %v1848, %v1844
          %v2161 = vpack.c.b16 %v1849, %v1845
          %v2162 = vpack.c.b16 %v1850, %v1846
          %v2163 = vpack.c.b16 %v1851, %v1847
          %v2164 = vpack.c.b16 %v1856, %v1852
          %v2165 = vpack.c.b16 %v1857, %v1853
          %v2166 = vpack.c.b16 %v1858, %v1854
          %v2167 = vpack.c.b16 %v1859, %v1855
          %v2168 = vpack.c.b16 %v1864, %v1860
          %v2169 = vpack.c.b16 %v1865, %v1861
          %v2170 = vpack.c.b16 %v1866, %v1862
          %v2171 = vpack.c.b16 %v1867, %v1863
          %v2172 = vpack.c.b16 %v1872, %v1868
          %v2173 = vpack.c.b16 %v1873, %v1869
          %v2174 = vpack.c.b16 %v1874, %v1870
          %v2175 = vpack.c.b16 %v1875, %v1871
          %v2176 = vpack.c.b16 %v1880, %v1876
          %v2177 = vpack.c.b16 %v1881, %v1877
          %v2178 = vpack.c.b16 %v1882, %v1878
          %v2179 = vpack.c.b16 %v1883, %v1879
          %v2180 = vpack.c.b16 %v1888, %v1884
          %v2181 = vpack.c.b16 %v1889, %v1885
          %v2182 = vpack.c.b16 %v1890, %v1886
          %v2183 = vpack.c.b16 %v1891, %v1887
          %v2184 = vpack.c.b16 %v1896, %v1892
          %v2185 = vpack.c.b16 %v1897, %v1893
          %v2186 = vpack.c.b16 %v1898, %v1894
          %v2187 = vpack.c.b16 %v1899, %v1895
          %v2188 = vpack.c.b16 %v1904, %v1900
          %v2189 = vpack.c.b16 %v1905, %v1901
          %v2190 = vpack.c.b16 %v1906, %v1902
          %v2191 = vpack.c.b16 %v1907, %v1903
          %v2192 = vpack.c.b16 %v1912, %v1908
          %v2193 = vpack.c.b16 %v1913, %v1909
          %v2194 = vpack.c.b16 %v1914, %v1910
          %v2195 = vpack.c.b16 %v1915, %v1911
          %v2196 = vpack.c.b16 %v1920, %v1916
          %v2197 = vpack.c.b16 %v1921, %v1917
          %v2198 = vpack.c.b16 %v1922, %v1918
          %v2199 = vpack.c.b16 %v1923, %v1919
          %v2200 = vpack.c.b16 %v1928, %v1924
          %v2201 = vpack.c.b16 %v1929, %v1925
          %v2202 = vpack.c.b16 %v1930, %v1926
          %v2203 = vpack.c.b16 %v1931, %v1927
          %v2204 = vpack.c.b16 %v1936, %v1932
          %v2205 = vpack.c.b16 %v1937, %v1933
          %v2206 = vpack.c.b16 %v1938, %v1934
          %v2207 = vpack.c.b16 %v1939, %v1935
          %v2208 = vpack.c.b16 %v1944, %v1940
          %v2209 = vpack.c.b16 %v1945, %v1941
          %v2210 = vpack.c.b16 %v1946, %v1942
          %v2211 = vpack.c.b16 %v1947, %v1943
          %v2212 = vpack.c.b16 %v1952, %v1948
          %v2213 = vpack.c.b16 %v1953, %v1949
          %v2214 = vpack.c.b16 %v1954, %v1950
          %v2215 = vpack.c.b16 %v1955, %v1951
          %v2216 = vpack.c.b16 %v1960, %v1956
          %v2217 = vpack.c.b16 %v1961, %v1957
          %v2218 = vpack.c.b16 %v1962, %v1958
          %v2219 = vpack.c.b16 %v1963, %v1959
          %v2220 = vpack.c.b16 %v1968, %v1964
          %v2221 = vpack.c.b16 %v1969, %v1965
          %v2222 = vpack.c.b16 %v1970, %v1966
          %v2223 = vpack.c.b16 %v1971, %v1967
          %v2224 = vpack.c.b16 %v1976, %v1972
          %v2225 = vpack.c.b16 %v1977, %v1973
          %v2226 = vpack.c.b16 %v1978, %v1974
          %v2227 = vpack.c.b16 %v1979, %v1975
          %v2228 = vpack.c.b16 %v1984, %v1980
          %v2229 = vpack.c.b16 %v1985, %v1981
          %v2230 = vpack.c.b16 %v1986, %v1982
          %v2231 = vpack.c.b16 %v1987, %v1983
          %v2232 = vpack.c.b16 %v1992, %v1988
          %v2233 = vpack.c.b16 %v1993, %v1989
          %v2234 = vpack.c.b16 %v1994, %v1990
          %v2235 = vpack.c.b16 %v1995, %v1991
          %v2236 = vpack.c.b16 %v2000, %v1996
          %v2237 = vpack.c.b16 %v2001, %v1997
          %v2238 = vpack.c.b16 %v2002, %v1998
          %v2239 = vpack.c.b16 %v2003, %v1999
          %v2240 = vpack.c.b16 %v2008, %v2004
          %v2241 = vpack.c.b16 %v2009, %v2005
          %v2242 = vpack.c.b16 %v2010, %v2006
          %v2243 = vpack.c.b16 %v2011, %v2007
          %v2244 = vpack.c.b16 %v2016, %v2012
          %v2245 = vpack.c.b16 %v2017, %v2013
          %v2246 = vpack.c.b16 %v2018, %v2014
          %v2247 = vpack.c.b16 %v2019, %v2015
          %v2248 = vpack.c.b16 %v2024, %v2020
          %v2249 = vpack.c.b16 %v2025, %v2021
          %v2250 = vpack.c.b16 %v2026, %v2022
          %v2251 = vpack.c.b16 %v2027, %v2023
          %v2252 = vpack.c.b16 %v2032, %v2028
          %v2253 = vpack.c.b16 %v2033, %v2029
          %v2254 = vpack.c.b16 %v2034, %v2030
          %v2255 = vpack.c.b16 %v2035, %v2031
          %v2256 = vpack.c.b16 %v2040, %v2036
          %v2257 = vpack.c.b16 %v2041, %v2037
          %v2258 = vpack.c.b16 %v2042, %v2038
          %v2259 = vpack.c.b16 %v2043, %v2039
          %v2260 = vpack.c.b16 %v2048, %v2044
          %v2261 = vpack.c.b16 %v2049, %v2045
          %v2262 = vpack.c.b16 %v2050, %v2046
          %v2263 = vpack.c.b16 %v2051, %v2047
          %v2264 = vpack.c.b16 %v2056, %v2052
          %v2265 = vpack.c.b16 %v2057, %v2053
          %v2266 = vpack.c.b16 %v2058, %v2054
          %v2267 = vpack.c.b16 %v2059, %v2055
          %v2268 = vpack.c.b16 %v2064, %v2060
          %v2269 = vpack.c.b16 %v2065, %v2061
          %v2270 = vpack.c.b16 %v2066, %v2062
          %v2271 = vpack.c.b16 %v2067, %v2063
          %v2272 = vpack.c.b16 %v2072, %v2068
          %v2273 = vpack.c.b16 %v2073, %v2069
          %v2274 = vpack.c.b16 %v2074, %v2070
          %v2275 = vpack.c.b16 %v2075, %v2071
          %v2276 = vpack.c.b16 %v2080, %v2076
          %v2277 = vpack.c.b16 %v2081, %v2077
          %v2278 = vpack.c.b16 %v2082, %v2078
          %v2279 = vpack.c.b16 %v2083, %v2079
          %v2280 = vpack.c.b16 %v2088, %v2084
          %v2281 = vpack.c.b16 %v2089, %v2085
          %v2282 = vpack.c.b16 %v2090, %v2086
          %v2283 = vpack.c.b16 %v2091, %v2087
          %2476 = vmatprep.subr.bf16.mxu0 %v2093
          %2477 = vmatpush1.bf16.msra.mxu0 %v2092
          %2478 = vmatprep.subr.bf16.mxu0 %v2097
          %2479 = vmatpush1.bf16.msra.mxu0 %v2096
          %2480 = vmatprep.subr.bf16.mxu0 %v2101
          %2481 = vmatpush1.bf16.msra.mxu0 %v2100
          %2482 = vmatprep.subr.bf16.mxu0 %v2105
          %2483 = vmatpush1.bf16.msra.mxu0 %v2104
          %2484 = vmatprep.subr.bf16.mxu0 %v2109
          %2485 = vmatpush1.bf16.msra.mxu0 %v2108
          %2486 = vmatprep.subr.bf16.mxu0 %v2113
          %2487 = vmatpush1.bf16.msra.mxu0 %v2112
          %2488 = vmatprep.subr.bf16.mxu0 %v2117
          %2489 = vmatpush1.bf16.msra.mxu0 %v2116
          %2490 = vmatprep.subr.bf16.mxu0 %v2121
          %2491 = vmatpush1.bf16.msra.mxu0 %v2120
          %2492 = vmatprep.subr.bf16.mxu0 %v2125
          %2493 = vmatpush1.bf16.msra.mxu0 %v2124
          %2494 = vmatprep.subr.bf16.mxu0 %v2129
          %2495 = vmatpush1.bf16.msra.mxu0 %v2128
          %2496 = vmatprep.subr.bf16.mxu0 %v2133
          %2497 = vmatpush1.bf16.msra.mxu0 %v2132
          %2498 = vmatprep.subr.bf16.mxu0 %v2137
          %2499 = vmatpush1.bf16.msra.mxu0 %v2136
          %2500 = vmatprep.subr.bf16.mxu0 %v2141
          %2501 = vmatpush1.bf16.msra.mxu0 %v2140
          %2502 = vmatprep.subr.bf16.mxu0 %v2145
          %2503 = vmatpush1.bf16.msra.mxu0 %v2144
          %2504 = vmatprep.subr.bf16.mxu0 %v2149
          %2505 = vmatpush1.bf16.msra.mxu0 %v2148
          %2506 = vmatprep.subr.bf16.mxu0 %v2153
          %2507 = vmatpush1.bf16.msra.mxu0 %v2152
          %2508 = vmatprep.mubr.bf16.mxu0 %v1319
          %2509 = vmatmul.mubr.bf16.gmra.mrb[0].mxu0 %v1318
          %v2510 = vpop.f32.mrb[0].mxu0
          %v2511 = vadd.f32 0.0, %v2510
          %v2512 = vpop.f32.mrb[0].mxu0
          %v2513 = vadd.f32 0.0, %v2512
          %v2514 = vpop.f32.mrb[0].mxu0
          %v2515 = vadd.f32 0.0, %v2514
          %v2516 = vpop.f32.mrb[0].mxu0
          %v2517 = vadd.f32 0.0, %v2516
          %2518 = vdwg.mxu0
          %2519 = vmatprep.subr.bf16.mxu0 %v2157
          %2520 = vmatpush1.bf16.msra.mxu0 %v2156
          %2521 = vmatprep.subr.bf16.mxu0 %v2161
          %2522 = vmatpush1.bf16.msra.mxu0 %v2160
          %2523 = vmatprep.subr.bf16.mxu0 %v2165
          %2524 = vmatpush1.bf16.msra.mxu0 %v2164
          %2525 = vmatprep.subr.bf16.mxu0 %v2169
          %2526 = vmatpush1.bf16.msra.mxu0 %v2168
          %2527 = vmatprep.subr.bf16.mxu0 %v2173
          %2528 = vmatpush1.bf16.msra.mxu0 %v2172
          %2529 = vmatprep.subr.bf16.mxu0 %v2177
          %2530 = vmatpush1.bf16.msra.mxu0 %v2176
          %2531 = vmatprep.subr.bf16.mxu0 %v2181
          %2532 = vmatpush1.bf16.msra.mxu0 %v2180
          %2533 = vmatprep.subr.bf16.mxu0 %v2185
          %2534 = vmatpush1.bf16.msra.mxu0 %v2184
          %2535 = vmatprep.subr.bf16.mxu0 %v2189
          %2536 = vmatpush1.bf16.msra.mxu0 %v2188
          %2537 = vmatprep.subr.bf16.mxu0 %v2193
          %2538 = vmatpush1.bf16.msra.mxu0 %v2192
          %2539 = vmatprep.subr.bf16.mxu0 %v2197
          %2540 = vmatpush1.bf16.msra.mxu0 %v2196
          %2541 = vmatprep.subr.bf16.mxu0 %v2201
          %2542 = vmatpush1.bf16.msra.mxu0 %v2200
          %2543 = vmatprep.subr.bf16.mxu0 %v2205
          %2544 = vmatpush1.bf16.msra.mxu0 %v2204
          %2545 = vmatprep.subr.bf16.mxu0 %v2209
          %2546 = vmatpush1.bf16.msra.mxu0 %v2208
          %2547 = vmatprep.subr.bf16.mxu0 %v2213
          %2548 = vmatpush1.bf16.msra.mxu0 %v2212
          %2549 = vmatprep.subr.bf16.mxu0 %v2217
          %2550 = vmatpush1.bf16.msra.mxu0 %v2216
          %2551 = vmatprep.mubr.bf16.mxu0 %v1321
          %2552 = vmatmul.mubr.bf16.gmra.mrb[0].mxu0 %v1320
          %v2553 = vpop.f32.mrb[0].mxu0
          %v2554 = vadd.f32 %v2511, %v2553
          %v2555 = vpop.f32.mrb[0].mxu0
          %v2556 = vadd.f32 %v2513, %v2555
          %v2557 = vpop.f32.mrb[0].mxu0
          %v2558 = vadd.f32 %v2515, %v2557
          %v2559 = vpop.f32.mrb[0].mxu0
          %v2560 = vadd.f32 %v2517, %v2559
          %2561 = vdwg.mxu0
          %2562 = vmatprep.subr.bf16.mxu0 %v2221
          %2563 = vmatpush1.bf16.msra.mxu0 %v2220
          %2564 = vmatprep.subr.bf16.mxu0 %v2225
          %2565 = vmatpush1.bf16.msra.mxu0 %v2224
          %2566 = vmatprep.subr.bf16.mxu0 %v2229
          %2567 = vmatpush1.bf16.msra.mxu0 %v2228
          %2568 = vmatprep.subr.bf16.mxu0 %v2233
          %2569 = vmatpush1.bf16.msra.mxu0 %v2232
          %2570 = vmatprep.subr.bf16.mxu0 %v2237
          %2571 = vmatpush1.bf16.msra.mxu0 %v2236
          %2572 = vmatprep.subr.bf16.mxu0 %v2241
          %2573 = vmatpush1.bf16.msra.mxu0 %v2240
          %2574 = vmatprep.subr.bf16.mxu0 %v2245
          %2575 = vmatpush1.bf16.msra.mxu0 %v2244
          %2576 = vmatprep.subr.bf16.mxu0 %v2249
          %2577 = vmatpush1.bf16.msra.mxu0 %v2248
          %2578 = vmatprep.subr.bf16.mxu0 %v2253
          %2579 = vmatpush1.bf16.msra.mxu0 %v2252
          %2580 = vmatprep.subr.bf16.mxu0 %v2257
          %2581 = vmatpush1.bf16.msra.mxu0 %v2256
          %2582 = vmatprep.subr.bf16.mxu0 %v2261
          %2583 = vmatpush1.bf16.msra.mxu0 %v2260
          %2584 = vmatprep.subr.bf16.mxu0 %v2265
          %2585 = vmatpush1.bf16.msra.mxu0 %v2264
          %2586 = vmatprep.subr.bf16.mxu0 %v2269
          %2587 = vmatpush1.bf16.msra.mxu0 %v2268
          %2588 = vmatprep.subr.bf16.mxu0 %v2273
          %2589 = vmatpush1.bf16.msra.mxu0 %v2272
          %2590 = vmatprep.subr.bf16.mxu0 %v2277
          %2591 = vmatpush1.bf16.msra.mxu0 %v2276
          %2592 = vmatprep.subr.bf16.mxu0 %v2281
          %2593 = vmatpush1.bf16.msra.mxu0 %v2280
          %2594 = vmatprep.mubr.bf16.mxu0 %v1323
          %2595 = vmatmul.mubr.bf16.gmra.mrb[0].mxu0 %v1322
          %v2596 = vpop.f32.mrb[0].mxu0
          %v2597 = vadd.f32 %v2554, %v2596
          %v2598 = vpop.f32.mrb[0].mxu0
          %v2599 = vadd.f32 %v2556, %v2598
          %v2600 = vpop.f32.mrb[0].mxu0
          %v2601 = vadd.f32 %v2558, %v2600
          %v2602 = vpop.f32.mrb[0].mxu0
          %v2603 = vadd.f32 %v2560, %v2602
          %2604 = vdwg.mxu0
          %2605 = vmatprep.subr.bf16.mxu0 %v2095
          %2606 = vmatpush1.bf16.msra.mxu0 %v2094
          %2607 = vmatprep.subr.bf16.mxu0 %v2099
          %2608 = vmatpush1.bf16.msra.mxu0 %v2098
          %2609 = vmatprep.subr.bf16.mxu0 %v2103
          %2610 = vmatpush1.bf16.msra.mxu0 %v2102
          %2611 = vmatprep.subr.bf16.mxu0 %v2107
          %2612 = vmatpush1.bf16.msra.mxu0 %v2106
          %2613 = vmatprep.subr.bf16.mxu0 %v2111
          %2614 = vmatpush1.bf16.msra.mxu0 %v2110
          %2615 = vmatprep.subr.bf16.mxu0 %v2115
          %2616 = vmatpush1.bf16.msra.mxu0 %v2114
          %2617 = vmatprep.subr.bf16.mxu0 %v2119
          %2618 = vmatpush1.bf16.msra.mxu0 %v2118
          %2619 = vmatprep.subr.bf16.mxu0 %v2123
          %2620 = vmatpush1.bf16.msra.mxu0 %v2122
          %2621 = vmatprep.subr.bf16.mxu0 %v2127
          %2622 = vmatpush1.bf16.msra.mxu0 %v2126
          %2623 = vmatprep.subr.bf16.mxu0 %v2131
          %2624 = vmatpush1.bf16.msra.mxu0 %v2130
          %2625 = vmatprep.subr.bf16.mxu0 %v2135
          %2626 = vmatpush1.bf16.msra.mxu0 %v2134
          %2627 = vmatprep.subr.bf16.mxu0 %v2139
          %2628 = vmatpush1.bf16.msra.mxu0 %v2138
          %2629 = vmatprep.subr.bf16.mxu0 %v2143
          %2630 = vmatpush1.bf16.msra.mxu0 %v2142
          %2631 = vmatprep.subr.bf16.mxu0 %v2147
          %2632 = vmatpush1.bf16.msra.mxu0 %v2146
          %2633 = vmatprep.subr.bf16.mxu0 %v2151
          %2634 = vmatpush1.bf16.msra.mxu0 %v2150
          %2635 = vmatprep.subr.bf16.mxu0 %v2155
          %2636 = vmatpush1.bf16.msra.mxu0 %v2154
          %2637 = vmatprep.mubr.bf16.mxu0 %v1319
          %2638 = vmatmul.mubr.bf16.gmra.mrb[0].mxu0 %v1318
          %v2639 = vpop.f32.mrb[0].mxu0
          %v2640 = vadd.f32 0.0, %v2639
          %v2641 = vpop.f32.mrb[0].mxu0
          %v2642 = vadd.f32 0.0, %v2641
          %v2643 = vpop.f32.mrb[0].mxu0
          %v2644 = vadd.f32 0.0, %v2643
          %v2645 = vpop.f32.mrb[0].mxu0
          %v2646 = vadd.f32 0.0, %v2645
          %2647 = vdwg.mxu0
          %2648 = vmatprep.subr.bf16.mxu0 %v2159
          %2649 = vmatpush1.bf16.msra.mxu0 %v2158
          %2650 = vmatprep.subr.bf16.mxu0 %v2163
          %2651 = vmatpush1.bf16.msra.mxu0 %v2162
          %2652 = vmatprep.subr.bf16.mxu0 %v2167
          %2653 = vmatpush1.bf16.msra.mxu0 %v2166
          %2654 = vmatprep.subr.bf16.mxu0 %v2171
          %2655 = vmatpush1.bf16.msra.mxu0 %v2170
          %2656 = vmatprep.subr.bf16.mxu0 %v2175
          %2657 = vmatpush1.bf16.msra.mxu0 %v2174
          %2658 = vmatprep.subr.bf16.mxu0 %v2179
          %2659 = vmatpush1.bf16.msra.mxu0 %v2178
          %2660 = vmatprep.subr.bf16.mxu0 %v2183
          %2661 = vmatpush1.bf16.msra.mxu0 %v2182
          %2662 = vmatprep.subr.bf16.mxu0 %v2187
          %2663 = vmatpush1.bf16.msra.mxu0 %v2186
          %2664 = vmatprep.subr.bf16.mxu0 %v2191
          %2665 = vmatpush1.bf16.msra.mxu0 %v2190
          %2666 = vmatprep.subr.bf16.mxu0 %v2195
          %2667 = vmatpush1.bf16.msra.mxu0 %v2194
          %2668 = vmatprep.subr.bf16.mxu0 %v2199
          %2669 = vmatpush1.bf16.msra.mxu0 %v2198
          %2670 = vmatprep.subr.bf16.mxu0 %v2203
          %2671 = vmatpush1.bf16.msra.mxu0 %v2202
          %2672 = vmatprep.subr.bf16.mxu0 %v2207
          %2673 = vmatpush1.bf16.msra.mxu0 %v2206
          %2674 = vmatprep.subr.bf16.mxu0 %v2211
          %2675 = vmatpush1.bf16.msra.mxu0 %v2210
          %2676 = vmatprep.subr.bf16.mxu0 %v2215
          %2677 = vmatpush1.bf16.msra.mxu0 %v2214
          %2678 = vmatprep.subr.bf16.mxu0 %v2219
          %2679 = vmatpush1.bf16.msra.mxu0 %v2218
          %2680 = vmatprep.mubr.bf16.mxu0 %v1321
          %2681 = vmatmul.mubr.bf16.gmra.mrb[0].mxu0 %v1320
          %v2682 = vpop.f32.mrb[0].mxu0
          %v2683 = vadd.f32 %v2640, %v2682
          %v2684 = vpop.f32.mrb[0].mxu0
          %v2685 = vadd.f32 %v2642, %v2684
          %v2686 = vpop.f32.mrb[0].mxu0
          %v2687 = vadd.f32 %v2644, %v2686
          %v2688 = vpop.f32.mrb[0].mxu0
          %v2689 = vadd.f32 %v2646, %v2688
          %2690 = vdwg.mxu0
          %2691 = vmatprep.subr.bf16.mxu0 %v2223
          %2692 = vmatpush1.bf16.msra.mxu0 %v2222
          %2693 = vmatprep.subr.bf16.mxu0 %v2227
          %2694 = vmatpush1.bf16.msra.mxu0 %v2226
          %2695 = vmatprep.subr.bf16.mxu0 %v2231
          %2696 = vmatpush1.bf16.msra.mxu0 %v2230
          %2697 = vmatprep.subr.bf16.mxu0 %v2235
          %2698 = vmatpush1.bf16.msra.mxu0 %v2234
          %2699 = vmatprep.subr.bf16.mxu0 %v2239
          %2700 = vmatpush1.bf16.msra.mxu0 %v2238
          %2701 = vmatprep.subr.bf16.mxu0 %v2243
          %2702 = vmatpush1.bf16.msra.mxu0 %v2242
          %2703 = vmatprep.subr.bf16.mxu0 %v2247
          %2704 = vmatpush1.bf16.msra.mxu0 %v2246
          %2705 = vmatprep.subr.bf16.mxu0 %v2251
          %2706 = vmatpush1.bf16.msra.mxu0 %v2250
          %2707 = vmatprep.subr.bf16.mxu0 %v2255
          %2708 = vmatpush1.bf16.msra.mxu0 %v2254
          %2709 = vmatprep.subr.bf16.mxu0 %v2259
          %2710 = vmatpush1.bf16.msra.mxu0 %v2258
          %2711 = vmatprep.subr.bf16.mxu0 %v2263
          %2712 = vmatpush1.bf16.msra.mxu0 %v2262
          %2713 = vmatprep.subr.bf16.mxu0 %v2267
          %2714 = vmatpush1.bf16.msra.mxu0 %v2266
          %2715 = vmatprep.subr.bf16.mxu0 %v2271
          %2716 = vmatpush1.bf16.msra.mxu0 %v2270
          %2717 = vmatprep.subr.bf16.mxu0 %v2275
          %2718 = vmatpush1.bf16.msra.mxu0 %v2274
          %2719 = vmatprep.subr.bf16.mxu0 %v2279
          %2720 = vmatpush1.bf16.msra.mxu0 %v2278
          %2721 = vmatprep.subr.bf16.mxu0 %v2283
          %2722 = vmatpush1.bf16.msra.mxu0 %v2282
          %2723 = vmatprep.mubr.bf16.mxu0 %v1323
          %2724 = vmatmul.mubr.bf16.gmra.mrb[0].mxu0 %v1322
          %v2725 = vpop.f32.mrb[0].mxu0
          %v2726 = vadd.f32 %v2683, %v2725
          %v2727 = vpop.f32.mrb[0].mxu0
          %v2728 = vadd.f32 %v2685, %v2727
          %v2729 = vpop.f32.mrb[0].mxu0
          %v2730 = vadd.f32 %v2687, %v2729
          %v2731 = vpop.f32.mrb[0].mxu0
          %v2732 = vadd.f32 %v2689, %v2731
          %2733 = vdwg.mxu0
          %2734 = vst [vmem:[#allocation13] sm:$0xff] %v2597
          %2735 = vst [vmem:[#allocation13 + $0x8] sm:$0xff] %v2599
          %2736 = vst [vmem:[#allocation13 + $0x10] sm:$0xff] %v2726
          %2737 = vst [vmem:[#allocation13 + $0x18] sm:$0xff] %v2728
          %2738 = vst [vmem:[#allocation13 + $0x20] sm:$0xff] %v2601
          %2739 = vst [vmem:[#allocation13 + $0x28] sm:$0xff] %v2603
          %2740 = vst [vmem:[#allocation13 + $0x30] sm:$0xff] %v2730
          %2741 = vst [vmem:[#allocation13 + $0x38] sm:$0xff] %v2732
        $region72: #{tpu_custom_call.1} parent=43 // pred_fallthru
          _
        %s2742 = smul.u32 2, %s33
        %p2743 = scmp.lt.s32.totalorder %s2742, 1
        %s2744 = scalar_select %p2743, %s2742, 1
        %s2745 = smul.addr %s2744, 8
        %s2746 = scalar_lea.vmem %s7, %s2745
        // Predicated region
        $region73: #{tpu_custom_call.1} parent=43 // pred_check
          %p2747 = pneg %p197
        $region74: #{tpu_custom_call.1} parent=43 // pred_check_branch
          %2749 = sbr.rel (%p2747) target = $region76
        $region75: #{tpu_custom_call.1} parent=43 // pred_region
          %s2750 = smul.u32 2, %s33
          %s2752 = ssub.s32 1024, 1024
          %2753 = vsyncadd [#allocation6], %s2752
          %s2754 = smul.addr %s2750, 4
          %s2755 = smul.addr %s2754, 128
          %s2756 = scalar_lea.hbm %s6, %s2755
          %s2757 = sshll.u32 [#allocation13], 4
          %s2758 = int_to_ptr.vmem [resolvable:$true] %s2757
          %2763 = dma.vmem_to_hbm [thread:$0]  %s2758, 1024, %s2756, [#allocation6], 512, 512, 32
        $region76: #{tpu_custom_call.1} parent=43 // pred_fallthru
          _
        // Predicated region
        $region77: #{tpu_custom_call.1} parent=43 // pred_check
          %p2764 = pneg %p223
        $region78: #{tpu_custom_call.1} parent=43 // pred_check_branch
          %2766 = sbr.rel (%p2764) target = $region80
        $region79: #{tpu_custom_call.1} parent=43 // pred_region
          %s2767 = smul.u32 2, %s33
        $region80: #{tpu_custom_call.1} parent=43 // pred_fallthru
          _
        // Predicated region
        $region81: #{tpu_custom_call.1} parent=43 // pred_check
          %p2768 = pneg %p197
        $region82: #{tpu_custom_call.1} parent=43 // pred_check_branch
          %2770 = sbr.rel (%p2768) target = $region84
        $region83: #{tpu_custom_call.1} parent=43 // pred_region
          %2771 = dma.done [#allocation6], 1024
        $region84: #{tpu_custom_call.1} parent=43 // pred_fallthru
          _
        // Predicated region
        $region85: #{tpu_custom_call.1} parent=43 // pred_check
          %p2772 = pneg %p223
        $region86: #{tpu_custom_call.1} parent=43 // pred_check_branch
          %2774 = sbr.rel (%p2772) target = $region88
        $region87: #{tpu_custom_call.1} parent=43 // pred_region
          %s2775 = smul.u32 2, %s33
          %p2776 = scmp.lt.s32.totalorder %s2775, 1
          %s2777 = scalar_select %p2776, %s2775, 1
          %s2778 = smul.addr %s2777, 8
          %s2779 = scalar_lea.vmem %s7, %s2778
        $region88: #{tpu_custom_call.1} parent=43 // pred_fallthru
          _
      $region44: #{tpu_custom_call.1} parent=5 // pred_fallthru
        _
      %p2780 = scmp.le.s32.totalorder 2, %s24
      // Predicated region
      $region89: #{tpu_custom_call.1} parent=5 // pred_check
        %p2781 = pneg %p2780
      $region90: #{tpu_custom_call.1} parent=5 // pred_check_branch
        %2783 = sbr.rel (%p2781) target = $region92
      $region91: #{tpu_custom_call.1} parent=5 // pred_region
        %s2784 = ssub.s32 %s24, 2
      $region92: #{tpu_custom_call.1} parent=5 // pred_fallthru
        _
    $region6: #{tpu_custom_call.1} parent=1 // loop_footer
      %s28 = sadd.s32 1, %s24
    $region7: #{tpu_custom_call.1} parent=1 // loop_footer_branch
      %23 = sbr.rel target = $region3
    $region8: #{tpu_custom_call.1} parent=1 // loop_exit
      _
    %2785 = vsyncpa [#allocation5], 1
    %s2786 = scalar_lea.sflag [#allocation5], 1
    %2787 = vsyncpa %s2786, 1
    %2788 = vsyncpa [#allocation8], 1
    %s2789 = scalar_lea.sflag [#allocation8], 1
    %2790 = vsyncpa %s2789, 1
    %2791 = vsyncpa [#allocation11], 1
    %2792 = vsyncpa [#allocation6], 1
    %s2793 = scalar_lea.sflag [#allocation6], 1
    %2794 = vsyncpa %s2793, 1

</llo_original>
